<compile_context>
chip_gen: v7x
topology: tpu7x:2x2x1
jax: 0.10.0
libtpu: 0.0.40
codegen_flags: <defaults>
</compile_context>

<pallas_src>
import functools

import jax
import jax.numpy as jnp
from jax.experimental import pallas as pl
from jax.experimental.pallas import tpu as pltpu


# ----------------------------- kernels --------------------------------------


def _conv_acc(x_ref, rhs_ref, b, hout, precision):
    """Three banded MXU matmuls -> (Hout, Wout*Cout) f32 accumulator, image b."""
    acc = jnp.dot(x_ref[b, 0:hout, :], rhs_ref[0],
                  preferred_element_type=jnp.float32, precision=precision)
    for kh in (1, 2):
        acc = acc + jnp.dot(x_ref[b, kh:kh + hout, :], rhs_ref[kh],
                            preferred_element_type=jnp.float32,
                            precision=precision)
    return acc


def _conv_relu_kernel(x_ref, rhs_ref, b_ref, o_ref, *, nb, hout, precision):
    bias = b_ref[...]                                      # (1, Wout*Cout) f32
    for b in range(nb):
        acc = _conv_acc(x_ref, rhs_ref, b, hout, precision) + bias
        o_ref[b] = jnp.maximum(acc, 0.0).astype(o_ref.dtype)


def _conv_stats_kernel(x_ref, rhs_ref, b_ref, y_ref, st_ref, *,
                       nb, hout, precision):
    bias = b_ref[...]
    inv_rows = 1.0 / float(hout)
    for b in range(nb):
        acc = _conv_acc(x_ref, rhs_ref, b, hout, precision) + bias
        # Per-image, per-lane (wo, o) statistics, centered in-register.
        s1 = jnp.sum(acc, axis=0, keepdims=True)           # (1, Wout*Cout)
        d = acc - s1 * inv_rows
        m2 = jnp.sum(d * d, axis=0, keepdims=True)         # (1, Wout*Cout)
        st_ref[b, 0:1, :] = s1
        st_ref[b, 1:2, :] = m2
        y_ref[b] = acc.astype(y_ref.dtype)


def _bn_relu_kernel(y_ref, scale_ref, shift_ref, o_ref, *, nb):
    scale = scale_ref[...]                                 # (1, Wout*Cout)
    shift = shift_ref[...]
    for b in range(nb):
        v = y_ref[b].astype(jnp.float32) * scale + shift
        o_ref[b] = jnp.maximum(v, 0.0).astype(o_ref.dtype)


# ----------------------------- wrapper ---------------------------------------


def _banded_rhs(weight, w, wout, padding, compute_dtype):
    """Block-banded (Toeplitz) RHS folding the 3 kw taps + W zero padding:
    rhs[kh, wi*Cin + c, wo*Cout + o] = weight[o, c, kh, wi - wo + padding]
    when 0 <= wi - wo + padding < 3, else 0."""
    cout, cin = weight.shape[0], weight.shape[1]
    w_t = jnp.transpose(weight, (2, 3, 1, 0)).astype(jnp.float32)   # (3,3,Cin,Cout)
    wi = jnp.arange(w)[:, None]
    wo = jnp.arange(wout)[None, :]
    kw = wi - wo + padding                                           # (W, Wout)
    valid = ((kw >= 0) & (kw < 3)).astype(jnp.float32)
    band = w_t[:, jnp.clip(kw, 0, 2)]                                # (3,W,Wout,Cin,Cout)
    band = band * valid[None, :, :, None, None]
    rhs = jnp.transpose(band, (0, 1, 3, 2, 4)).reshape(3, w * cin, wout * cout)
    return rhs.astype(compute_dtype)


def _pick_nb(n, per_image_bytes, vmem_budget=24 << 20):
    """Images per grid step: >= 2 balanced steps when possible (v7x megacore),
    bounded per-step VMEM footprint, and a divisor of n."""
    if n <= 1:
        return 1
    nb = max(1, min(n // 2, vmem_budget // max(per_image_bytes, 1)))
    while n % nb:
        nb -= 1
    return nb


def conv_bn_act(x_nchw, weight, bias, gamma=None, beta=None, *,
                padding: int = 0, use_batchnorm: bool = False,
                compute_dtype=jnp.float32, eps: float = 1e-5):
    """ConvBNAct forward.

    x_nchw : (N, Cin, H, W)   weight : (Cout, Cin, 3, 3)   bias/gamma/beta : (Cout,)
    compute_dtype: MXU operand dtype (jnp.bfloat16 for the v5e/v6e/v7x fast
    path); accumulation is always f32.   returns: (N, Cout, Hout, Wout) f32.
    """
    n, cin, h, w = x_nchw.shape
    cout = weight.shape[0]
    hout = h + 2 * padding - 2
    wout = w + 2 * padding - 2
    hp = h + 2 * padding
    wcin = w * cin
    wcout = wout * cout
    f32_compute = jnp.dtype(compute_dtype) == jnp.dtype(jnp.float32)
    inter_dtype = jnp.float32 if f32_compute else jnp.bfloat16
    precision = (jax.lax.Precision.HIGHEST if f32_compute
                 else jax.lax.Precision.DEFAULT)

    # ---- wrapper layout glue (all math lives in the Pallas kernels) ----
    # NCHW -> (N, Hp, W*Cin); only the H padding is materialized (W padding is
    # folded into the banded RHS).
    x_nhwc = jnp.transpose(x_nchw, (0, 2, 3, 1))
    x_hpad = jnp.pad(x_nhwc, ((0, 0), (padding, padding), (0, 0), (0, 0)))
    x2d = x_hpad.reshape(n, hp, wcin).astype(compute_dtype)

    rhs = _banded_rhs(weight, w, wout, padding, compute_dtype)  # (3, W*Cin, Wout*Cout)
    bias_l = jnp.tile(bias.astype(jnp.float32), wout).reshape(1, wcout)

    itemsize = jnp.dtype(compute_dtype).itemsize
    per_image_bytes = 2 * (hp * wcin * itemsize + hout * wcout * 4 + 2 * wcout * 4)
    nb = _pick_nb(n, per_image_bytes)
    grid = (n // nb,)

    in_specs = [
        pl.BlockSpec((nb, hp, wcin), lambda i: (i, 0, 0)),
        pl.BlockSpec((3, wcin, wcout), lambda i: (0, 0, 0)),
        pl.BlockSpec((1, wcout), lambda i: (0, 0)),
    ]
    y_spec = pl.BlockSpec((nb, hout, wcout), lambda i: (i, 0, 0))
    cparams = pltpu.CompilerParams(dimension_semantics=("parallel",))

    if not use_batchnorm:
        y2d = pl.pallas_call(
            functools.partial(_conv_relu_kernel, nb=nb, hout=hout,
                              precision=precision),
            out_shape=jax.ShapeDtypeStruct((n, hout, wcout), jnp.float32),
            grid=grid,
            in_specs=in_specs,
            out_specs=y_spec,
            compiler_params=cparams,
        )(x2d, rhs, bias_l)
    else:
        # Pass 1: conv + bias, plus packed per-image (sum, centered-M2) stats.
        st_spec = pl.BlockSpec((nb, 2, wcout), lambda i: (i, 0, 0))
        y2d, stats = pl.pallas_call(
            functools.partial(_conv_stats_kernel, nb=nb, hout=hout,
                              precision=precision),
            out_shape=(jax.ShapeDtypeStruct((n, hout, wcout), inter_dtype),
                       jax.ShapeDtypeStruct((n, 2, wcout), jnp.float32)),
            grid=grid,
            in_specs=in_specs,
            out_specs=(y_spec, st_spec),
            compiler_params=cparams,
        )(x2d, rhs, bias_l)

        # Chan/Welford parallel combination over the (image, wo) groups
        # (count = Hout each): stable, no E[x^2] - E[x]^2 cancellation.
        s1 = stats[:, 0, :].reshape(n, wout, cout)
        m2 = stats[:, 1, :].reshape(n, wout, cout)
        cnt_g = float(hout)
        total = float(n * wout * hout)
        mean = jnp.sum(s1, axis=(0, 1)) / total                      # (Cout,)
        mean_g = s1 / cnt_g
        var = (jnp.sum(m2, axis=(0, 1)) +
               cnt_g * jnp.sum((mean_g - mean) ** 2, axis=(0, 1))) / total
        scale = gamma.astype(jnp.float32) * jax.lax.rsqrt(var + eps)
        shift = beta.astype(jnp.float32) - mean * scale
        scale_l = jnp.tile(scale, wout).reshape(1, wcout)            # lane = wo*Cout+o
        shift_l = jnp.tile(shift, wout).reshape(1, wcout)

        # Pass 2: lane-dense scale/shift + ReLU, updating y2d in place.
        y2d = pl.pallas_call(
            functools.partial(_bn_relu_kernel, nb=nb),
            out_shape=jax.ShapeDtypeStruct((n, hout, wcout), inter_dtype),
            grid=grid,
            in_specs=[y_spec,
                      pl.BlockSpec((1, wcout), lambda i: (0, 0)),
                      pl.BlockSpec((1, wcout), lambda i: (0, 0))],
            out_specs=y_spec,
            input_output_aliases={0: 0},
            compiler_params=cparams,
        )(y2d, scale_l, shift_l)

    # TODO(synk): nn.Dropout(0.2) is identity in eval / use_dropout=False;
    # training-mode dropout (pltpu.prng_random_bits mask) is not implemented.
    out_nhwc = y2d.reshape(n, hout, wout, cout).astype(jnp.float32)
    return jnp.transpose(out_nhwc, (0, 3, 1, 2))


# ----------------------------- reference & test ------------------------------


def _reference(x_nchw, weight, bias, gamma, beta, *, padding, use_batchnorm):
    """Pure-JAX reference (lax conv) mirroring the PyTorch module."""
    y = jax.lax.conv_general_dilated(
        x_nchw.astype(jnp.float32), weight.astype(jnp.float32),
        window_strides=(1, 1),
        padding=[(padding, padding), (padding, padding)],
        dimension_numbers=("NCHW", "OIHW", "NCHW"),
        precision=jax.lax.Precision.HIGHEST)
    y = y + bias.reshape(1, -1, 1, 1)
    if use_batchnorm:
        mean = jnp.mean(y, axis=(0, 2, 3), keepdims=True)
        var = jnp.mean((y - mean) ** 2, axis=(0, 2, 3), keepdims=True)
        y = (y - mean) * jax.lax.rsqrt(var + 1e-5)
        y = y * gamma.reshape(1, -1, 1, 1) + beta.reshape(1, -1, 1, 1)
    return jnp.maximum(y, 0.0)


if __name__ == "__main__":
    # Small shapes consistent with the module: ConvBNAct(4, 8, padding=1)
    N, CIN, H, W = 2, 4, 16, 16
    COUT, PAD = 8, 1

    key = jax.random.PRNGKey(0)
    kx, kwt, kb, kg, kbe = jax.random.split(key, 5)
    x = jax.random.normal(kx, (N, CIN, H, W), dtype=jnp.float32)
    fan_in = CIN * 9
    bound = 1.0 / (fan_in ** 0.5)
    weight = jax.random.uniform(kwt, (COUT, CIN, 3, 3), minval=-bound,
                                maxval=bound, dtype=jnp.float32)
    bias = jax.random.uniform(kb, (COUT,), minval=-bound, maxval=bound,
                              dtype=jnp.float32)
    gamma = 1.0 + 0.1 * jax.random.normal(kg, (COUT,), dtype=jnp.float32)
    beta = 0.1 * jax.random.normal(kbe, (COUT,), dtype=jnp.float32)

    ok = True

    # f32 MXU operands: matches the PyTorch module's default numerics.
    for use_bn in (False, True):
        fn = jax.jit(functools.partial(conv_bn_act, padding=PAD,
                                       use_batchnorm=use_bn,
                                       compute_dtype=jnp.float32))
        out = jax.block_until_ready(fn(x, weight, bias, gamma, beta))
        ref = _reference(x, weight, bias, gamma, beta,
                         padding=PAD, use_batchnorm=use_bn)
        ok = ok and bool(jnp.allclose(out, ref, atol=1e-4, rtol=1e-4))

    # bf16 MXU operands (fast path), f32 accumulation -> looser tolerance.
    fn16 = jax.jit(functools.partial(conv_bn_act, padding=PAD,
                                     use_batchnorm=False,
                                     compute_dtype=jnp.bfloat16))
    out16 = jax.block_until_ready(fn16(x, weight, bias, gamma, beta))
    ref0 = _reference(x, weight, bias, gamma, beta,
                      padding=PAD, use_batchnorm=False)
    ok = ok and bool(jnp.allclose(out16, ref0, atol=5e-2, rtol=5e-2))

    if ok:
        print("KERNEL_OK")
    else:
        print("KERNEL_MISMATCH")
</pallas_src>

<mosaic_0001>
module attributes {stable_mosaic.version = 11 : i64} {
  func.func @_conv_relu_kernel(%arg0: i32, %arg1: memref<1x18x64xf32, #tpu.memory_space<vmem>>, %arg2: memref<3x64x128xf32, #tpu.memory_space<vmem>>, %arg3: memref<1x128xf32, #tpu.memory_space<vmem>>, %arg4: memref<1x16x128xf32, #tpu.memory_space<vmem>>) attributes {dimension_semantics = [#tpu.dimension_semantics<parallel>], iteration_bounds = array<i64: 2>, scalar_prefetch = 0 : i64, scratch_operands = 0 : i64, tpu.core_type = #tpu.core_type<tc>, window_params = [{transform_indices = @transform_0, window_bounds = array<i64: 1, 18, 64>}, {pipeline_mode = #tpu.pipeline_mode<synchronous>, transform_indices = @transform_1, window_bounds = array<i64: 3, 64, 128>}, {pipeline_mode = #tpu.pipeline_mode<synchronous>, transform_indices = @transform_2, window_bounds = array<i64: 1, 128>}, {transform_indices = @transform_3, window_bounds = array<i64: 1, 16, 128>}]} {
    %c0 = arith.constant 0 : index
    %c0_0 = arith.constant 0 : index
    %0 = vector.load %arg3[%c0, %c0_0] : memref<1x128xf32, #tpu.memory_space<vmem>>, vector<1x128xf32>
    %c0_1 = arith.constant 0 : index
    %c0_2 = arith.constant 0 : index
    %c0_3 = arith.constant 0 : index
    %1 = vector.load %arg1[%c0_1, %c0_2, %c0_3] : memref<1x18x64xf32, #tpu.memory_space<vmem>>, vector<1x16x64xf32>
    %2 = vector.shape_cast %1 : vector<1x16x64xf32> to vector<16x64xf32>
    %c0_4 = arith.constant 0 : index
    %c0_5 = arith.constant 0 : index
    %c0_6 = arith.constant 0 : index
    %3 = vector.load %arg2[%c0_4, %c0_5, %c0_6] : memref<3x64x128xf32, #tpu.memory_space<vmem>>, vector<1x64x128xf32>
    %4 = vector.shape_cast %3 : vector<1x64x128xf32> to vector<64x128xf32>
    %cst = arith.constant dense<0.000000e+00> : vector<16x128xf32>
    %5 = tpu.matmul %2, %4, %cst {dimension_numbers = #tpu.dot_dimension_numbers<[1], [0], [0], [1], [0, 0, 1, 1], [], []>, precision = #tpu.contract_precision<fp32>} : vector<16x64xf32>, vector<64x128xf32>, vector<16x128xf32> -> vector<16x128xf32>
    %c0_7 = arith.constant 0 : index
    %c1 = arith.constant 1 : index
    %c0_8 = arith.constant 0 : index
    %6 = vector.load %arg1[%c0_7, %c1, %c0_8] : memref<1x18x64xf32, #tpu.memory_space<vmem>>, vector<1x16x64xf32>
    %7 = vector.shape_cast %6 : vector<1x16x64xf32> to vector<16x64xf32>
    %c1_9 = arith.constant 1 : index
    %c0_10 = arith.constant 0 : index
    %c0_11 = arith.constant 0 : index
    %8 = vector.load %arg2[%c1_9, %c0_10, %c0_11] : memref<3x64x128xf32, #tpu.memory_space<vmem>>, vector<1x64x128xf32>
    %9 = vector.shape_cast %8 : vector<1x64x128xf32> to vector<64x128xf32>
    %cst_12 = arith.constant dense<0.000000e+00> : vector<16x128xf32>
    %10 = tpu.matmul %7, %9, %cst_12 {dimension_numbers = #tpu.dot_dimension_numbers<[1], [0], [0], [1], [0, 0, 1, 1], [], []>, precision = #tpu.contract_precision<fp32>} : vector<16x64xf32>, vector<64x128xf32>, vector<16x128xf32> -> vector<16x128xf32>
    %11 = arith.addf %5, %10 : vector<16x128xf32>
    %c0_13 = arith.constant 0 : index
    %c2 = arith.constant 2 : index
    %c0_14 = arith.constant 0 : index
    %12 = vector.load %arg1[%c0_13, %c2, %c0_14] : memref<1x18x64xf32, #tpu.memory_space<vmem>>, vector<1x16x64xf32>
    %13 = vector.shape_cast %12 : vector<1x16x64xf32> to vector<16x64xf32>
    %c2_15 = arith.constant 2 : index
    %c0_16 = arith.constant 0 : index
    %c0_17 = arith.constant 0 : index
    %14 = vector.load %arg2[%c2_15, %c0_16, %c0_17] : memref<3x64x128xf32, #tpu.memory_space<vmem>>, vector<1x64x128xf32>
    %15 = vector.shape_cast %14 : vector<1x64x128xf32> to vector<64x128xf32>
    %cst_18 = arith.constant dense<0.000000e+00> : vector<16x128xf32>
    %16 = tpu.matmul %13, %15, %cst_18 {dimension_numbers = #tpu.dot_dimension_numbers<[1], [0], [0], [1], [0, 0, 1, 1], [], []>, precision = #tpu.contract_precision<fp32>} : vector<16x64xf32>, vector<64x128xf32>, vector<16x128xf32> -> vector<16x128xf32>
    %17 = arith.addf %11, %16 : vector<16x128xf32>
    %18 = vector.broadcast %0 : vector<1x128xf32> to vector<16x128xf32>
    %19 = arith.addf %17, %18 : vector<16x128xf32>
    %cst_19 = arith.constant 0.000000e+00 : f32
    %20 = vector.broadcast %cst_19 : f32 to vector<16x128xf32>
    %21 = arith.maximumf %19, %20 : vector<16x128xf32>
    %c0_20 = arith.constant 0 : index
    %c0_21 = arith.constant 0 : index
    %c0_22 = arith.constant 0 : index
    %22 = vector.load %arg4[%c0_20, %c0_21, %c0_22] : memref<1x16x128xf32, #tpu.memory_space<vmem>>, vector<1x16x128xf32>
    %23 = vector.shape_cast %22 : vector<1x16x128xf32> to vector<16x128xf32>
    %24 = vector.shape_cast %21 : vector<16x128xf32> to vector<1x16x128xf32>
    tpu.vector_store %arg4[%c0_20, %c0_21, %c0_22], %24 {strides = array<i32>} : memref<1x16x128xf32, #tpu.memory_space<vmem>>, vector<1x16x128xf32>,
    return
  }
  func.func @transform_0(%arg0: i32) -> (i32, i32, i32) {
    %c0_i32 = arith.constant 0 : i32
    %c0_i32_0 = arith.constant 0 : i32
    %c0_i32_1 = arith.constant 0 : i32
    return %arg0, %c0_i32, %c0_i32_0 : i32, i32, i32
  }
  func.func @transform_1(%arg0: i32) -> (i32, i32, i32) {
    %c0_i32 = arith.constant 0 : i32
    %c0_i32_0 = arith.constant 0 : i32
    %c0_i32_1 = arith.constant 0 : i32
    %c0_i32_2 = arith.constant 0 : i32
    return %c0_i32, %c0_i32_0, %c0_i32_1 : i32, i32, i32
  }
  func.func @transform_2(%arg0: i32) -> (i32, i32) {
    %c0_i32 = arith.constant 0 : i32
    %c0_i32_0 = arith.constant 0 : i32
    %c0_i32_1 = arith.constant 0 : i32
    return %c0_i32, %c0_i32_0 : i32, i32
  }
  func.func @transform_3(%arg0: i32) -> (i32, i32, i32) {
    %c0_i32 = arith.constant 0 : i32
    %c0_i32_0 = arith.constant 0 : i32
    %c0_i32_1 = arith.constant 0 : i32
    return %arg0, %c0_i32, %c0_i32_0 : i32, i32, i32
  }
}

</mosaic_0001>

<llo_original>
// kernel: tile.8
$region0: #{tile.8}
  #allocation0 [shape = 's32[1]{0}', space=sflag, size = 0x4, scoped, tag = 'scoped memory for tile.8']
  %s0 = inlined_call_operand.vmem [shape: f32[8], index: 0, kind: input, shape index: {}]
  %s1 = inlined_call_operand.vmem [shape: f32[16,8], index: 1, kind: output, shape index: {}]
  // Predicated region
  $region2: #{tile.8} parent=0 // pred_check
    _
  $region3: #{tile.8} parent=0 // pred_check_branch
    %3 = sbr.rel (0) target = $region5
  $region4: #{tile.8} parent=0 // pred_region
    _
  $region5: #{tile.8} parent=0 // pred_fallthru
    _
  %v4 = vld [vmem:[%s0] ss:$0 sm:$0xff]
  %5 = vst [vmem:[%s1] sm:$0xff] %v4
  %s6 = scalar_lea.vmem %s1, 8
  %7 = vst [vmem:[%s6] sm:$0xff] %v4

// kernel: tile.9
$region0: #{tile.9}
  %s0 = inlined_call_operand.vmem [shape: f32[16,8], index: 0, kind: input, shape index: {}]
  %s1 = inlined_call_operand.vmem [shape: f32[1,128], index: 1, kind: output, shape index: {}]
  $region1: #{tile.9} parent=0
    #allocation0 [shape = 'u8[4096]{0}', space=vmem, size = 0x1000, scoped, tag = 'scoped mem for output reshape']
    %v2 = vld [vmem:[%s0] sm:$0x1]
    %vm3 = vcmask 64512
    %4 = vst.msk [vmem:[#allocation0] sm:$0x1] %vm3, %v2
    %s5 = scalar_lea.vmem %s0, 15
    %v6 = vld [vmem:[%s5] sm:$0x1]
    %7 = vrot.lane.b32.xlu0 %v6, 120
    %v8 = vpop.permute.xlu0 %7
    %vm9 = vcmask 1048512
    %10 = vst.msk [vmem:[#allocation0] sm:$0x1] %vm9, %v8
    %s11 = scalar_lea.vmem %s0, 14
    %v12 = vld [vmem:[%s11] sm:$0x1]
    %13 = vrot.lane.b32.xlu0 %v12, 112
    %v14 = vpop.permute.xlu0 %13
    %vm15 = vcmask 982912
    %16 = vst.msk [vmem:[#allocation0] sm:$0x1] %vm15, %v14
    %s17 = scalar_lea.vmem %s0, 13
    %v18 = vld [vmem:[%s17] sm:$0x1]
    %19 = vrot.lane.b32.xlu0 %v18, 104
    %v20 = vpop.permute.xlu0 %19
    %vm21 = vcmask 917312
    %22 = vst.msk [vmem:[#allocation0] sm:$0x1] %vm21, %v20
    %s23 = scalar_lea.vmem %s0, 12
    %v24 = vld [vmem:[%s23] sm:$0x1]
    %25 = vrot.lane.b32.xlu0 %v24, 96
    %v26 = vpop.permute.xlu0 %25
    %vm27 = vcmask 851712
    %28 = vst.msk [vmem:[#allocation0] sm:$0x1] %vm27, %v26
    %s29 = scalar_lea.vmem %s0, 11
    %v30 = vld [vmem:[%s29] sm:$0x1]
    %31 = vrot.lane.b32.xlu0 %v30, 88
    %v32 = vpop.permute.xlu0 %31
    %vm33 = vcmask 786112
    %34 = vst.msk [vmem:[#allocation0] sm:$0x1] %vm33, %v32
    %s35 = scalar_lea.vmem %s0, 10
    %v36 = vld [vmem:[%s35] sm:$0x1]
    %37 = vrot.lane.b32.xlu0 %v36, 80
    %v38 = vpop.permute.xlu0 %37
    %vm39 = vcmask 720512
    %40 = vst.msk [vmem:[#allocation0] sm:$0x1] %vm39, %v38
    %s41 = scalar_lea.vmem %s0, 9
    %v42 = vld [vmem:[%s41] sm:$0x1]
    %43 = vrot.lane.b32.xlu0 %v42, 72
    %v44 = vpop.permute.xlu0 %43
    %vm45 = vcmask 654912
    %46 = vst.msk [vmem:[#allocation0] sm:$0x1] %vm45, %v44
    %s47 = scalar_lea.vmem %s0, 8
    %v48 = vld [vmem:[%s47] sm:$0x1]
    %49 = vrot.lane.b32.xlu0 %v48, 64
    %v50 = vpop.permute.xlu0 %49
    %vm51 = vcmask 589312
    %52 = vst.msk [vmem:[#allocation0] sm:$0x1] %vm51, %v50
    %s53 = scalar_lea.vmem %s0, 7
    %v54 = vld [vmem:[%s53] sm:$0x1]
    %55 = vrot.lane.b32.xlu0 %v54, 56
    %v56 = vpop.permute.xlu0 %55
    %vm57 = vcmask 523712
    %58 = vst.msk [vmem:[#allocation0] sm:$0x1] %vm57, %v56
    %s59 = scalar_lea.vmem %s0, 6
    %v60 = vld [vmem:[%s59] sm:$0x1]
    %61 = vrot.lane.b32.xlu0 %v60, 48
    %v62 = vpop.permute.xlu0 %61
    %vm63 = vcmask 458112
    %64 = vst.msk [vmem:[#allocation0] sm:$0x1] %vm63, %v62
    %s65 = scalar_lea.vmem %s0, 5
    %v66 = vld [vmem:[%s65] sm:$0x1]
    %67 = vrot.lane.b32.xlu0 %v66, 40
    %v68 = vpop.permute.xlu0 %67
    %vm69 = vcmask 392512
    %70 = vst.msk [vmem:[#allocation0] sm:$0x1] %vm69, %v68
    %s71 = scalar_lea.vmem %s0, 4
    %v72 = vld [vmem:[%s71] sm:$0x1]
    %73 = vrot.lane.b32.xlu0 %v72, 32
    %v74 = vpop.permute.xlu0 %73
    %vm75 = vcmask 326912
    %76 = vst.msk [vmem:[#allocation0] sm:$0x1] %vm75, %v74
    %s77 = scalar_lea.vmem %s0, 3
    %v78 = vld [vmem:[%s77] sm:$0x1]
    %79 = vrot.lane.b32.xlu0 %v78, 24
    %v80 = vpop.permute.xlu0 %79
    %vm81 = vcmask 261312
    %82 = vst.msk [vmem:[#allocation0] sm:$0x1] %vm81, %v80
    %s83 = scalar_lea.vmem %s0, 2
    %v84 = vld [vmem:[%s83] sm:$0x1]
    %85 = vrot.lane.b32.xlu0 %v84, 16
    %v86 = vpop.permute.xlu0 %85
    %vm87 = vcmask 195712
    %88 = vst.msk [vmem:[#allocation0] sm:$0x1] %vm87, %v86
    %s89 = scalar_lea.vmem %s0, 1
    %v90 = vld [vmem:[%s89] sm:$0x1]
    %91 = vrot.lane.b32.xlu0 %v90, 8
    %v92 = vpop.permute.xlu0 %91
    %vm93 = vcmask 130112
    %94 = vst.msk [vmem:[#allocation0] sm:$0x1] %vm93, %v92
    %s96 = sshllo.u32 0, 1
    %v98 = vld [vmem:[#allocation0] sm:%s96]
    %s99 = sshllo.u32 0, 1
    %100 = vst [vmem:[%s1] sm:%s99] %v98

// kernel: conv_bn_act.1
$region0: #{conv_bn_act.1}
  #allocation0 [shape = 'u32[]', space=smem, size = 0x4, offset = 0x4, fixed_abs, tag = 'smem constant byte address 0x4 - core index']
  #allocation1 [shape = 'u32[144,128]{1,0:T(1,128)}', space=vmem, size = 0x12000, scoped, tag = 'internal scratch']
  %s0 = inlined_call_operand.vmem [shape: f32[2,18,64], index: 0, kind: input, shape index: {}]
  %s1 = inlined_call_operand.vmem [shape: f32[3,64,128], index: 1, kind: input, shape index: {}]
  %s2 = inlined_call_operand.vmem [shape: f32[1,128], index: 2, kind: input, shape index: {}]
  %s3 = inlined_call_operand.vmem [shape: f32[2,16,128], index: 3, kind: output, shape index: {}]
  %s4 = sld [smem:[#allocation0]]
  $region45: #{conv_bn_act.1} parent=0
    _
  %s6 = ssub.s32 1, %s4
  %s7 = scalar_select 0, %s6, %s4
  loop: start=0, step=1, limit=4
  $region2: #{conv_bn_act.1} parent=0 // loop_pre_header
    _
  $region3: #{conv_bn_act.1} parent=0 // loop_header
    %s9 = sphi 0, %s13
    %p10 = scmp.ge.s32.totalorder %s9, 4
    %s19 = sphi 0, %s21
    %s22 = sphi 0, %s19
    %s23 = sphi 0, %s22
    %s39 = sphi 0, %s23
    %s43 = sphi 0, %s43
    %s45 = sphi 0, %s43
    %s46 = sphi 0, %s45
    %s60 = sphi 0, %s46
    %s64 = sphi 0, %s64
    %s66 = sphi 0, %s64
    %s67 = sphi 0, %s66
    %s81 = sphi 0, %s67
    %s87 = sphi 0, %s89
    %s90 = sphi 0, %s87
    %s91 = sphi 0, %s90
    %s107 = sphi 0, %s91
  $region4: #{conv_bn_act.1} parent=0 // loop_header_branch
    %12 = sbr.rel (%p10) target = $region8
  $region5: #{conv_bn_act.1} parent=0 // loop_body
    %s14 = ssub.s32 %s9, 1
    %s15 = ssub.s32 %s9, 2
    %s16 = sadd.s32 %s9, 1
    %s17 = ssub.s32 %s9, %s16
    %p18 = scmp.eq.s32.totalorder %s17, 0
    %s20 = sadd.s32 %s19, 1
    %s21 = scalar_select %p18, %s19, %s20
    %p24 = pneg %p18
    %p25 = scmp.eq.s32.totalorder %s9, 1
    %p26 = por %p24, %p25
    %p27 = scmp.ne.s32.totalorder %s19, %s22
    %p28 = scmp.eq.s32.totalorder %s9, 0
    %p29 = por %p27, %p28
    %p30 = scmp.ne.s32.totalorder %s19, %s22
    %p31 = scmp.eq.s32.totalorder %s14, 1
    %p32 = por %p30, %p31
    %p33 = scmp.ne.s32.totalorder %s22, %s23
    %p34 = scmp.eq.s32.totalorder %s14, 0
    %p35 = por %p33, %p34
    %p36 = scmp.ne.s32.totalorder %s22, %s23
    %p37 = scmp.eq.s32.totalorder %s15, 1
    %p38 = por %p36, %p37
    %p40 = scmp.ne.s32.totalorder %s23, %s39
    %p41 = scmp.eq.s32.totalorder %s15, 0
    %p42 = por %p40, %p41
    %s44 = sadd.s32 %s43, 1
    %p47 = scmp.eq.s32.totalorder %s9, 1
    %p48 = scmp.ne.s32.totalorder %s43, %s45
    %p49 = scmp.eq.s32.totalorder %s9, 0
    %p50 = por %p48, %p49
    %p51 = scmp.ne.s32.totalorder %s43, %s45
    %p52 = scmp.eq.s32.totalorder %s14, 1
    %p53 = por %p51, %p52
    %p54 = scmp.ne.s32.totalorder %s45, %s46
    %p55 = scmp.eq.s32.totalorder %s14, 0
    %p56 = por %p54, %p55
    %p57 = scmp.ne.s32.totalorder %s45, %s46
    %p58 = scmp.eq.s32.totalorder %s15, 1
    %p59 = por %p57, %p58
    %p61 = scmp.ne.s32.totalorder %s46, %s60
    %p62 = scmp.eq.s32.totalorder %s15, 0
    %p63 = por %p61, %p62
    %s65 = sadd.s32 %s64, 1
    %p68 = scmp.eq.s32.totalorder %s9, 1
    %p69 = scmp.ne.s32.totalorder %s64, %s66
    %p70 = scmp.eq.s32.totalorder %s9, 0
    %p71 = por %p69, %p70
    %p72 = scmp.ne.s32.totalorder %s64, %s66
    %p73 = scmp.eq.s32.totalorder %s14, 1
    %p74 = por %p72, %p73
    %p75 = scmp.ne.s32.totalorder %s66, %s67
    %p76 = scmp.eq.s32.totalorder %s14, 0
    %p77 = por %p75, %p76
    %p78 = scmp.ne.s32.totalorder %s66, %s67
    %p79 = scmp.eq.s32.totalorder %s15, 1
    %p80 = por %p78, %p79
    %p82 = scmp.ne.s32.totalorder %s67, %s81
    %p83 = scmp.eq.s32.totalorder %s15, 0
    %p84 = por %p82, %p83
    %s85 = ssub.s32 %s9, %s16
    %p86 = scmp.eq.s32.totalorder %s85, 0
    %s88 = sadd.s32 %s87, 1
    %s89 = scalar_select %p86, %s87, %s88
    %p92 = pneg %p86
    %p93 = scmp.eq.s32.totalorder %s9, 1
    %p94 = por %p92, %p93
    %p95 = scmp.ne.s32.totalorder %s87, %s90
    %p96 = scmp.eq.s32.totalorder %s9, 0
    %p97 = por %p95, %p96
    %p98 = scmp.ne.s32.totalorder %s87, %s90
    %p99 = scmp.eq.s32.totalorder %s14, 1
    %p100 = por %p98, %p99
    %p101 = scmp.ne.s32.totalorder %s90, %s91
    %p102 = scmp.eq.s32.totalorder %s14, 0
    %p103 = por %p101, %p102
    %p104 = scmp.ne.s32.totalorder %s90, %s91
    %p105 = scmp.eq.s32.totalorder %s15, 1
    %p106 = por %p104, %p105
    %p108 = scmp.ne.s32.totalorder %s91, %s107
    %p109 = scmp.eq.s32.totalorder %s15, 0
    %p110 = por %p108, %p109
    %p111 = scmp.le.s32.totalorder 1, %s9
    %p112 = scmp.lt.s32.totalorder %s9, 3
    %p113 = pnand %p111, %p112
    %p114 = pneg %p113
    // Predicated region
    $region9: #{conv_bn_act.1} parent=5 // pred_check
      _
    $region10: #{conv_bn_act.1} parent=5 // pred_check_branch
      %116 = sbr.rel (%p113) target = $region12
    $region11: #{conv_bn_act.1} parent=5 // pred_region
      %s117 = ssub.s32 %s9, 1
      // Predicated region
      $region13: #{conv_bn_act.1} parent=11 // pred_check
        %p118 = pneg %p56
      $region14: #{conv_bn_act.1} parent=11 // pred_check_branch
        %120 = sbr.rel (%p118) target = $region16
      $region15: #{conv_bn_act.1} parent=11 // pred_region
        _
      $region16: #{conv_bn_act.1} parent=11 // pred_fallthru
        _
      // Predicated region
      $region17: #{conv_bn_act.1} parent=11 // pred_check
        %p121 = pneg %p77
      $region18: #{conv_bn_act.1} parent=11 // pred_check_branch
        %123 = sbr.rel (%p121) target = $region20
      $region19: #{conv_bn_act.1} parent=11 // pred_region
        _
      $region20: #{conv_bn_act.1} parent=11 // pred_fallthru
        _
    $region12: #{conv_bn_act.1} parent=5 // pred_fallthru
      _
    %p124 = scmp.lt.s32.totalorder %s9, 2
    // Predicated region
    $region21: #{conv_bn_act.1} parent=5 // pred_check
      %p125 = pneg %p124
    $region22: #{conv_bn_act.1} parent=5 // pred_check_branch
      %127 = sbr.rel (%p125) target = $region24
    $region23: #{conv_bn_act.1} parent=5 // pred_region
      // Predicated region
      $region25: #{conv_bn_act.1} parent=23 // pred_check
        %p128 = pneg %p29
      $region26: #{conv_bn_act.1} parent=23 // pred_check_branch
        %130 = sbr.rel (%p128) target = $region28
      $region27: #{conv_bn_act.1} parent=23 // pred_region
        %p131 = scmp.lt.s32.totalorder %s9, 1
        %s132 = scalar_select %p131, %s9, 1
        %s133 = smul.addr %s132, 3
        %s134 = smul.addr %s133, 8
        %s135 = scalar_lea.vmem %s0, %s134
      $region28: #{conv_bn_act.1} parent=23 // pred_fallthru
        _
    $region24: #{conv_bn_act.1} parent=5 // pred_fallthru
      _
    %p136 = scmp.le.s32.totalorder 1, %s9
    %p137 = scmp.lt.s32.totalorder %s9, 3
    %p138 = pnand %p136, %p137
    %p139 = pneg %p138
    // Predicated region
    $region29: #{conv_bn_act.1} parent=5 // pred_check
      _
    $region30: #{conv_bn_act.1} parent=5 // pred_check_branch
      %141 = sbr.rel (%p138) target = $region32
    $region31: #{conv_bn_act.1} parent=5 // pred_region
      %s142 = ssub.s32 %s9, 1
      %p143 = scmp.lt.s32.totalorder %s14, 1
      %s144 = scalar_select %p143, %s14, 1
      %s145 = smul.addr %s144, 3
      %s146 = smul.addr %s145, 8
      %s147 = scalar_lea.vmem %s0, %s146
      %p148 = pneg %p35
      %p149 = pneg %p32
      %p150 = pneg %p56
      %p151 = pneg %p53
      %p152 = pneg %p77
      %p153 = pneg %p74
      %p154 = pneg %p103
      %p155 = pneg %p100
      %p156 = scmp.lt.s32.totalorder %s14, 1
      %s157 = scalar_select %p156, %s14, 1
      %s158 = smul.addr %s157, 2
      %s159 = smul.addr %s158, 8
      %s160 = scalar_lea.vmem %s3, %s159
      %p161 = scmp.lt.s32.totalorder %s14, 1
      %s162 = scalar_select %p161, %s14, 1
      %s163 = smul.addr %s162, 3
      %s164 = smul.addr %s163, 8
      %s165 = scalar_lea.vmem %s0, %s164
      %p166 = scmp.lt.s32.totalorder %s14, 1
      %s167 = scalar_select %p166, %s14, 1
      %s168 = smul.addr %s167, 2
      %s169 = smul.addr %s168, 8
      %s170 = scalar_lea.vmem %s3, %s169
      %v171 = vld [vmem:[%s2] sm:$0x1]
      %v172 = vld [vmem:[%s165] sm:$0xff]
      %v173 = vld [vmem:[%s165 + $0x8] sm:$0xff]
      %v174 = vld [vmem:[%s1] sm:$0xff]
      %v175 = vld [vmem:[%s1 + $0x8] sm:$0xff]
      %v176 = vld [vmem:[%s1 + $0x10] sm:$0xff]
      %v177 = vld [vmem:[%s1 + $0x18] sm:$0xff]
      %v178 = vld [vmem:[%s1 + $0x20] sm:$0xff]
      %v179 = vld [vmem:[%s1 + $0x28] sm:$0xff]
      %v180 = vld [vmem:[%s1 + $0x30] sm:$0xff]
      %v181 = vld [vmem:[%s1 + $0x38] sm:$0xff]
      %v182 = vld [vmem:[%s165 + $0x1] sm:$0xff]
      %v183 = vld [vmem:[%s165 + $0x9] sm:$0xff]
      %s184 = scalar_lea.vmem %s1, 64
      %v185 = vld [vmem:[%s184] sm:$0xff]
      %v186 = vld [vmem:[%s184 + $0x8] sm:$0xff]
      %v187 = vld [vmem:[%s184 + $0x10] sm:$0xff]
      %v188 = vld [vmem:[%s184 + $0x18] sm:$0xff]
      %v189 = vld [vmem:[%s184 + $0x20] sm:$0xff]
      %v190 = vld [vmem:[%s184 + $0x28] sm:$0xff]
      %v191 = vld [vmem:[%s184 + $0x30] sm:$0xff]
      %v192 = vld [vmem:[%s184 + $0x38] sm:$0xff]
      %vm193 = vcmask 523264
      %v195 = vsel %vm193, %v182, 0
      %v198 = vsel %vm193, %v183, 0
      %200 = vmatprep.subr.mxu0 0.0
      %v201 = vand.u32 %v185, 4294901760
      %202 = vmatpush1.msra.mxu0 %v201
      %203 = vmatprep.subr.mxu0 0.0
      %v204 = vand.u32 %v186, 4294901760
      %205 = vmatpush1.msra.mxu0 %v204
      %206 = vmatprep.subr.mxu0 0.0
      %v207 = vand.u32 %v187, 4294901760
      %208 = vmatpush1.msra.mxu0 %v207
      %209 = vmatprep.subr.mxu0 0.0
      %v210 = vand.u32 %v188, 4294901760
      %211 = vmatpush1.msra.mxu0 %v210
      %212 = vmatprep.subr.mxu0 0.0
      %v213 = vand.u32 %v189, 4294901760
      %214 = vmatpush1.msra.mxu0 %v213
      %215 = vmatprep.subr.mxu0 0.0
      %v216 = vand.u32 %v190, 4294901760
      %217 = vmatpush1.msra.mxu0 %v216
      %218 = vmatprep.subr.mxu0 0.0
      %v219 = vand.u32 %v191, 4294901760
      %220 = vmatpush1.msra.mxu0 %v219
      %221 = vmatprep.subr.mxu0 0.0
      %v222 = vand.u32 %v192, 4294901760
      %223 = vmatpush1.msra.mxu0 %v222
      %224 = vmatprep.subr.mxu0 0.0
      %225 = vmatpush1.msra.mxu0 0.0
      %226 = vmatprep.subr.mxu0 0.0
      %227 = vmatpush1.msra.mxu0 0.0
      %228 = vmatprep.subr.mxu0 0.0
      %229 = vmatpush1.msra.mxu0 0.0
      %230 = vmatprep.subr.mxu0 0.0
      %231 = vmatpush1.msra.mxu0 0.0
      %232 = vmatprep.subr.mxu0 0.0
      %233 = vmatpush1.msra.mxu0 0.0
      %234 = vmatprep.subr.mxu0 0.0
      %235 = vmatpush1.msra.mxu0 0.0
      %236 = vmatprep.subr.mxu0 0.0
      %237 = vmatpush1.msra.mxu0 0.0
      %238 = vmatprep.subr.mxu0 0.0
      %239 = vmatpush1.msra.mxu0 0.0
      %240 = vmatprep.subr.mxu0 0.0
      %241 = vmatpush1.msra.mxu0 0.0
      %242 = vmatprep.subr.mxu0 0.0
      %243 = vmatpush1.msra.mxu0 0.0
      %244 = vmatprep.subr.mxu0 0.0
      %245 = vmatpush1.msra.mxu0 0.0
      %246 = vmatprep.subr.mxu0 0.0
      %247 = vmatpush1.msra.mxu0 0.0
      %248 = vmatprep.subr.mxu0 0.0
      %249 = vmatpush1.msra.mxu0 0.0
      %250 = vmatprep.subr.mxu0 0.0
      %251 = vmatpush1.msra.mxu0 0.0
      %252 = vmatprep.subr.mxu0 0.0
      %253 = vmatpush1.msra.mxu0 0.0
      %254 = vmatprep.subr.mxu0 0.0
      %255 = vmatpush1.msra.mxu0 0.0
      %256 = vmatprep.subr.mxu0 0.0
      %257 = vmatpush1.msra.mxu0 0.0
      %258 = vmatprep.subr.mxu0 0.0
      %259 = vmatpush1.msra.mxu0 0.0
      %260 = vmatprep.subr.mxu0 0.0
      %261 = vmatpush1.msra.mxu0 0.0
      %262 = vmatprep.subr.mxu0 0.0
      %263 = vmatpush1.msra.mxu0 0.0
      %264 = vmatprep.subr.mxu0 0.0
      %265 = vmatpush1.msra.mxu0 0.0
      %266 = vmatprep.subr.mxu0 0.0
      %267 = vmatpush1.msra.mxu0 0.0
      %268 = vmatprep.subr.mxu0 0.0
      %269 = vmatpush1.msra.mxu0 0.0
      %270 = vmatprep.subr.mxu0 0.0
      %271 = vmatpush1.msra.mxu0 0.0
      %272 = vmatprep.mubr.f32.mxu0 0.0
      %v273 = vand.u32 %v195, 4294901760
      %v274 = vsub.f32 %v195, %v273
      %v275 = vand.u32 %v274, 4294901760
      %v276 = vsub.f32 %v274, %v275
      %v277 = vand.u32 %v276, 4294901760
      %278 = vmatmul.mubr.f32.gmra.mrb[0].mxu0 %v277
      %v279 = vpop.f32.mrb[0].mxu0
      %v280 = vadd.f32 0.0, %v279
      %v281 = vpop.f32.mrb[0].mxu0
      %282 = vmatprep.mubr.f32.mxu0 0.0
      %v283 = vand.u32 %v198, 4294901760
      %v284 = vsub.f32 %v198, %v283
      %v285 = vand.u32 %v284, 4294901760
      %v286 = vsub.f32 %v284, %v285
      %v287 = vand.u32 %v286, 4294901760
      %288 = vmatmul.mubr.f32.gmra.mrb[0].mxu0 %v287
      %v289 = vpop.f32.mrb[0].mxu0
      %v290 = vadd.f32 0.0, %v289
      %v291 = vpop.f32.mrb[0].mxu0
      %292 = vdwg.mxu0
      %293 = vmatprep.subr.mxu0 0.0
      %v294 = vand.u32 %v185, 4294901760
      %v295 = vsub.f32 %v185, %v294
      %v296 = vand.u32 %v295, 4294901760
      %v297 = vsub.f32 %v295, %v296
      %v298 = vand.u32 %v297, 4294901760
      %299 = vmatpush1.msra.mxu0 %v298
      %300 = vmatprep.subr.mxu0 0.0
      %v301 = vand.u32 %v186, 4294901760
      %v302 = vsub.f32 %v186, %v301
      %v303 = vand.u32 %v302, 4294901760
      %v304 = vsub.f32 %v302, %v303
      %v305 = vand.u32 %v304, 4294901760
      %306 = vmatpush1.msra.mxu0 %v305
      %307 = vmatprep.subr.mxu0 0.0
      %v308 = vand.u32 %v187, 4294901760
      %v309 = vsub.f32 %v187, %v308
      %v310 = vand.u32 %v309, 4294901760
      %v311 = vsub.f32 %v309, %v310
      %v312 = vand.u32 %v311, 4294901760
      %313 = vmatpush1.msra.mxu0 %v312
      %314 = vmatprep.subr.mxu0 0.0
      %v315 = vand.u32 %v188, 4294901760
      %v316 = vsub.f32 %v188, %v315
      %v317 = vand.u32 %v316, 4294901760
      %v318 = vsub.f32 %v316, %v317
      %v319 = vand.u32 %v318, 4294901760
      %320 = vmatpush1.msra.mxu0 %v319
      %321 = vmatprep.subr.mxu0 0.0
      %v322 = vand.u32 %v189, 4294901760
      %v323 = vsub.f32 %v189, %v322
      %v324 = vand.u32 %v323, 4294901760
      %v325 = vsub.f32 %v323, %v324
      %v326 = vand.u32 %v325, 4294901760
      %327 = vmatpush1.msra.mxu0 %v326
      %328 = vmatprep.subr.mxu0 0.0
      %v329 = vand.u32 %v190, 4294901760
      %v330 = vsub.f32 %v190, %v329
      %v331 = vand.u32 %v330, 4294901760
      %v332 = vsub.f32 %v330, %v331
      %v333 = vand.u32 %v332, 4294901760
      %334 = vmatpush1.msra.mxu0 %v333
      %335 = vmatprep.subr.mxu0 0.0
      %v336 = vand.u32 %v191, 4294901760
      %v337 = vsub.f32 %v191, %v336
      %v338 = vand.u32 %v337, 4294901760
      %v339 = vsub.f32 %v337, %v338
      %v340 = vand.u32 %v339, 4294901760
      %341 = vmatpush1.msra.mxu0 %v340
      %342 = vmatprep.subr.mxu0 0.0
      %v343 = vand.u32 %v192, 4294901760
      %v344 = vsub.f32 %v192, %v343
      %v345 = vand.u32 %v344, 4294901760
      %v346 = vsub.f32 %v344, %v345
      %v347 = vand.u32 %v346, 4294901760
      %348 = vmatpush1.msra.mxu0 %v347
      %349 = vmatprep.subr.mxu0 0.0
      %350 = vmatpush1.msra.mxu0 0.0
      %351 = vmatprep.subr.mxu0 0.0
      %352 = vmatpush1.msra.mxu0 0.0
      %353 = vmatprep.subr.mxu0 0.0
      %354 = vmatpush1.msra.mxu0 0.0
      %355 = vmatprep.subr.mxu0 0.0
      %356 = vmatpush1.msra.mxu0 0.0
      %357 = vmatprep.subr.mxu0 0.0
      %358 = vmatpush1.msra.mxu0 0.0
      %359 = vmatprep.subr.mxu0 0.0
      %360 = vmatpush1.msra.mxu0 0.0
      %361 = vmatprep.subr.mxu0 0.0
      %362 = vmatpush1.msra.mxu0 0.0
      %363 = vmatprep.subr.mxu0 0.0
      %364 = vmatpush1.msra.mxu0 0.0
      %365 = vmatprep.subr.mxu0 0.0
      %366 = vmatpush1.msra.mxu0 0.0
      %367 = vmatprep.subr.mxu0 0.0
      %368 = vmatpush1.msra.mxu0 0.0
      %369 = vmatprep.subr.mxu0 0.0
      %370 = vmatpush1.msra.mxu0 0.0
      %371 = vmatprep.subr.mxu0 0.0
      %372 = vmatpush1.msra.mxu0 0.0
      %373 = vmatprep.subr.mxu0 0.0
      %374 = vmatpush1.msra.mxu0 0.0
      %375 = vmatprep.subr.mxu0 0.0
      %376 = vmatpush1.msra.mxu0 0.0
      %377 = vmatprep.subr.mxu0 0.0
      %378 = vmatpush1.msra.mxu0 0.0
      %379 = vmatprep.subr.mxu0 0.0
      %380 = vmatpush1.msra.mxu0 0.0
      %381 = vmatprep.subr.mxu0 0.0
      %382 = vmatpush1.msra.mxu0 0.0
      %383 = vmatprep.subr.mxu0 0.0
      %384 = vmatpush1.msra.mxu0 0.0
      %385 = vmatprep.subr.mxu0 0.0
      %386 = vmatpush1.msra.mxu0 0.0
      %387 = vmatprep.subr.mxu0 0.0
      %388 = vmatpush1.msra.mxu0 0.0
      %389 = vmatprep.subr.mxu0 0.0
      %390 = vmatpush1.msra.mxu0 0.0
      %391 = vmatprep.subr.mxu0 0.0
      %392 = vmatpush1.msra.mxu0 0.0
      %393 = vmatprep.subr.mxu0 0.0
      %394 = vmatpush1.msra.mxu0 0.0
      %395 = vmatprep.subr.mxu0 0.0
      %396 = vmatpush1.msra.mxu0 0.0
      %397 = vmatprep.mubr.f32.mxu0 0.0
      %v398 = vand.u32 %v195, 4294901760
      %399 = vmatmul.mubr.f32.gmra.mrb[0].mxu0 %v398
      %v400 = vpop.f32.mrb[0].mxu0
      %v401 = vadd.f32 %v280, %v400
      %v402 = vpop.f32.mrb[0].mxu0
      %403 = vmatprep.mubr.f32.mxu0 0.0
      %v404 = vand.u32 %v198, 4294901760
      %405 = vmatmul.mubr.f32.gmra.mrb[0].mxu0 %v404
      %v406 = vpop.f32.mrb[0].mxu0
      %v407 = vadd.f32 %v290, %v406
      %v408 = vpop.f32.mrb[0].mxu0
      %409 = vdwg.mxu0
      %410 = vmatprep.subr.mxu0 0.0
      %v411 = vand.u32 %v185, 4294901760
      %v412 = vsub.f32 %v185, %v411
      %413 = vmatpush1.msra.mxu0 %v412
      %414 = vmatprep.subr.mxu0 0.0
      %v415 = vand.u32 %v186, 4294901760
      %v416 = vsub.f32 %v186, %v415
      %417 = vmatpush1.msra.mxu0 %v416
      %418 = vmatprep.subr.mxu0 0.0
      %v419 = vand.u32 %v187, 4294901760
      %v420 = vsub.f32 %v187, %v419
      %421 = vmatpush1.msra.mxu0 %v420
      %422 = vmatprep.subr.mxu0 0.0
      %v423 = vand.u32 %v188, 4294901760
      %v424 = vsub.f32 %v188, %v423
      %425 = vmatpush1.msra.mxu0 %v424
      %426 = vmatprep.subr.mxu0 0.0
      %v427 = vand.u32 %v189, 4294901760
      %v428 = vsub.f32 %v189, %v427
      %429 = vmatpush1.msra.mxu0 %v428
      %430 = vmatprep.subr.mxu0 0.0
      %v431 = vand.u32 %v190, 4294901760
      %v432 = vsub.f32 %v190, %v431
      %433 = vmatpush1.msra.mxu0 %v432
      %434 = vmatprep.subr.mxu0 0.0
      %v435 = vand.u32 %v191, 4294901760
      %v436 = vsub.f32 %v191, %v435
      %437 = vmatpush1.msra.mxu0 %v436
      %438 = vmatprep.subr.mxu0 0.0
      %v439 = vand.u32 %v192, 4294901760
      %v440 = vsub.f32 %v192, %v439
      %441 = vmatpush1.msra.mxu0 %v440
      %442 = vmatprep.subr.mxu0 0.0
      %443 = vmatpush1.msra.mxu0 0.0
      %444 = vmatprep.subr.mxu0 0.0
      %445 = vmatpush1.msra.mxu0 0.0
      %446 = vmatprep.subr.mxu0 0.0
      %447 = vmatpush1.msra.mxu0 0.0
      %448 = vmatprep.subr.mxu0 0.0
      %449 = vmatpush1.msra.mxu0 0.0
      %450 = vmatprep.subr.mxu0 0.0
      %451 = vmatpush1.msra.mxu0 0.0
      %452 = vmatprep.subr.mxu0 0.0
      %453 = vmatpush1.msra.mxu0 0.0
      %454 = vmatprep.subr.mxu0 0.0
      %455 = vmatpush1.msra.mxu0 0.0
      %456 = vmatprep.subr.mxu0 0.0
      %457 = vmatpush1.msra.mxu0 0.0
      %458 = vmatprep.subr.mxu0 0.0
      %459 = vmatpush1.msra.mxu0 0.0
      %460 = vmatprep.subr.mxu0 0.0
      %461 = vmatpush1.msra.mxu0 0.0
      %462 = vmatprep.subr.mxu0 0.0
      %463 = vmatpush1.msra.mxu0 0.0
      %464 = vmatprep.subr.mxu0 0.0
      %465 = vmatpush1.msra.mxu0 0.0
      %466 = vmatprep.subr.mxu0 0.0
      %467 = vmatpush1.msra.mxu0 0.0
      %468 = vmatprep.subr.mxu0 0.0
      %469 = vmatpush1.msra.mxu0 0.0
      %470 = vmatprep.subr.mxu0 0.0
      %471 = vmatpush1.msra.mxu0 0.0
      %472 = vmatprep.subr.mxu0 0.0
      %473 = vmatpush1.msra.mxu0 0.0
      %474 = vmatprep.subr.mxu0 0.0
      %475 = vmatpush1.msra.mxu0 0.0
      %476 = vmatprep.subr.mxu0 0.0
      %477 = vmatpush1.msra.mxu0 0.0
      %478 = vmatprep.subr.mxu0 0.0
      %479 = vmatpush1.msra.mxu0 0.0
      %480 = vmatprep.subr.mxu0 0.0
      %481 = vmatpush1.msra.mxu0 0.0
      %482 = vmatprep.subr.mxu0 0.0
      %483 = vmatpush1.msra.mxu0 0.0
      %484 = vmatprep.subr.mxu0 0.0
      %485 = vmatpush1.msra.mxu0 0.0
      %486 = vmatprep.subr.mxu0 0.0
      %487 = vmatpush1.msra.mxu0 0.0
      %488 = vmatprep.subr.mxu0 0.0
      %489 = vmatpush1.msra.mxu0 0.0
      %490 = vmatprep.mubr.f32.mxu0 0.0
      %v491 = vand.u32 %v195, 4294901760
      %v492 = vsub.f32 %v195, %v491
      %493 = vmatmul.mubr.f32.gmra.mrb[0].mxu0 %v492
      %v494 = vpop.f32.mrb[0].mxu0
      %v495 = vadd.f32 %v401, %v494
      %v496 = vpop.f32.mrb[0].mxu0
      %497 = vmatprep.mubr.f32.mxu0 0.0
      %v498 = vand.u32 %v198, 4294901760
      %v499 = vsub.f32 %v198, %v498
      %500 = vmatmul.mubr.f32.gmra.mrb[0].mxu0 %v499
      %v501 = vpop.f32.mrb[0].mxu0
      %v502 = vadd.f32 %v407, %v501
      %v503 = vpop.f32.mrb[0].mxu0
      %504 = vdwg.mxu0
      %505 = vmatprep.subr.mxu0 0.0
      %v506 = vand.u32 %v185, 4294901760
      %507 = vmatpush1.msra.mxu0 %v506
      %508 = vmatprep.subr.mxu0 0.0
      %v509 = vand.u32 %v186, 4294901760
      %510 = vmatpush1.msra.mxu0 %v509
      %511 = vmatprep.subr.mxu0 0.0
      %v512 = vand.u32 %v187, 4294901760
      %513 = vmatpush1.msra.mxu0 %v512
      %514 = vmatprep.subr.mxu0 0.0
      %v515 = vand.u32 %v188, 4294901760
      %516 = vmatpush1.msra.mxu0 %v515
      %517 = vmatprep.subr.mxu0 0.0
      %v518 = vand.u32 %v189, 4294901760
      %519 = vmatpush1.msra.mxu0 %v518
      %520 = vmatprep.subr.mxu0 0.0
      %v521 = vand.u32 %v190, 4294901760
      %522 = vmatpush1.msra.mxu0 %v521
      %523 = vmatprep.subr.mxu0 0.0
      %v524 = vand.u32 %v191, 4294901760
      %525 = vmatpush1.msra.mxu0 %v524
      %526 = vmatprep.subr.mxu0 0.0
      %v527 = vand.u32 %v192, 4294901760
      %528 = vmatpush1.msra.mxu0 %v527
      %529 = vmatprep.subr.mxu0 0.0
      %530 = vmatpush1.msra.mxu0 0.0
      %531 = vmatprep.subr.mxu0 0.0
      %532 = vmatpush1.msra.mxu0 0.0
      %533 = vmatprep.subr.mxu0 0.0
      %534 = vmatpush1.msra.mxu0 0.0
      %535 = vmatprep.subr.mxu0 0.0
      %536 = vmatpush1.msra.mxu0 0.0
      %537 = vmatprep.subr.mxu0 0.0
      %538 = vmatpush1.msra.mxu0 0.0
      %539 = vmatprep.subr.mxu0 0.0
      %540 = vmatpush1.msra.mxu0 0.0
      %541 = vmatprep.subr.mxu0 0.0
      %542 = vmatpush1.msra.mxu0 0.0
      %543 = vmatprep.subr.mxu0 0.0
      %544 = vmatpush1.msra.mxu0 0.0
      %545 = vmatprep.subr.mxu0 0.0
      %546 = vmatpush1.msra.mxu0 0.0
      %547 = vmatprep.subr.mxu0 0.0
      %548 = vmatpush1.msra.mxu0 0.0
      %549 = vmatprep.subr.mxu0 0.0
      %550 = vmatpush1.msra.mxu0 0.0
      %551 = vmatprep.subr.mxu0 0.0
      %552 = vmatpush1.msra.mxu0 0.0
      %553 = vmatprep.subr.mxu0 0.0
      %554 = vmatpush1.msra.mxu0 0.0
      %555 = vmatprep.subr.mxu0 0.0
      %556 = vmatpush1.msra.mxu0 0.0
      %557 = vmatprep.subr.mxu0 0.0
      %558 = vmatpush1.msra.mxu0 0.0
      %559 = vmatprep.subr.mxu0 0.0
      %560 = vmatpush1.msra.mxu0 0.0
      %561 = vmatprep.subr.mxu0 0.0
      %562 = vmatpush1.msra.mxu0 0.0
      %563 = vmatprep.subr.mxu0 0.0
      %564 = vmatpush1.msra.mxu0 0.0
      %565 = vmatprep.subr.mxu0 0.0
      %566 = vmatpush1.msra.mxu0 0.0
      %567 = vmatprep.subr.mxu0 0.0
      %568 = vmatpush1.msra.mxu0 0.0
      %569 = vmatprep.subr.mxu0 0.0
      %570 = vmatpush1.msra.mxu0 0.0
      %571 = vmatprep.subr.mxu0 0.0
      %572 = vmatpush1.msra.mxu0 0.0
      %573 = vmatprep.subr.mxu0 0.0
      %574 = vmatpush1.msra.mxu0 0.0
      %575 = vmatprep.subr.mxu0 0.0
      %576 = vmatpush1.msra.mxu0 0.0
      %577 = vmatprep.mubr.f32.mxu0 0.0
      %v578 = vand.u32 %v195, 4294901760
      %v579 = vsub.f32 %v195, %v578
      %v580 = vand.u32 %v579, 4294901760
      %581 = vmatmul.mubr.f32.gmra.mrb[0].mxu0 %v580
      %v582 = vpop.f32.mrb[0].mxu0
      %v583 = vadd.f32 %v495, %v582
      %v584 = vpop.f32.mrb[0].mxu0
      %585 = vmatprep.mubr.f32.mxu0 0.0
      %v586 = vand.u32 %v198, 4294901760
      %v587 = vsub.f32 %v198, %v586
      %v588 = vand.u32 %v587, 4294901760
      %589 = vmatmul.mubr.f32.gmra.mrb[0].mxu0 %v588
      %v590 = vpop.f32.mrb[0].mxu0
      %v591 = vadd.f32 %v502, %v590
      %v592 = vpop.f32.mrb[0].mxu0
      %593 = vdwg.mxu0
      %594 = vmatprep.subr.mxu0 0.0
      %v595 = vand.u32 %v185, 4294901760
      %v596 = vsub.f32 %v185, %v595
      %v597 = vand.u32 %v596, 4294901760
      %598 = vmatpush1.msra.mxu0 %v597
      %599 = vmatprep.subr.mxu0 0.0
      %v600 = vand.u32 %v186, 4294901760
      %v601 = vsub.f32 %v186, %v600
      %v602 = vand.u32 %v601, 4294901760
      %603 = vmatpush1.msra.mxu0 %v602
      %604 = vmatprep.subr.mxu0 0.0
      %v605 = vand.u32 %v187, 4294901760
      %v606 = vsub.f32 %v187, %v605
      %v607 = vand.u32 %v606, 4294901760
      %608 = vmatpush1.msra.mxu0 %v607
      %609 = vmatprep.subr.mxu0 0.0
      %v610 = vand.u32 %v188, 4294901760
      %v611 = vsub.f32 %v188, %v610
      %v612 = vand.u32 %v611, 4294901760
      %613 = vmatpush1.msra.mxu0 %v612
      %614 = vmatprep.subr.mxu0 0.0
      %v615 = vand.u32 %v189, 4294901760
      %v616 = vsub.f32 %v189, %v615
      %v617 = vand.u32 %v616, 4294901760
      %618 = vmatpush1.msra.mxu0 %v617
      %619 = vmatprep.subr.mxu0 0.0
      %v620 = vand.u32 %v190, 4294901760
      %v621 = vsub.f32 %v190, %v620
      %v622 = vand.u32 %v621, 4294901760
      %623 = vmatpush1.msra.mxu0 %v622
      %624 = vmatprep.subr.mxu0 0.0
      %v625 = vand.u32 %v191, 4294901760
      %v626 = vsub.f32 %v191, %v625
      %v627 = vand.u32 %v626, 4294901760
      %628 = vmatpush1.msra.mxu0 %v627
      %629 = vmatprep.subr.mxu0 0.0
      %v630 = vand.u32 %v192, 4294901760
      %v631 = vsub.f32 %v192, %v630
      %v632 = vand.u32 %v631, 4294901760
      %633 = vmatpush1.msra.mxu0 %v632
      %634 = vmatprep.subr.mxu0 0.0
      %635 = vmatpush1.msra.mxu0 0.0
      %636 = vmatprep.subr.mxu0 0.0
      %637 = vmatpush1.msra.mxu0 0.0
      %638 = vmatprep.subr.mxu0 0.0
      %639 = vmatpush1.msra.mxu0 0.0
      %640 = vmatprep.subr.mxu0 0.0
      %641 = vmatpush1.msra.mxu0 0.0
      %642 = vmatprep.subr.mxu0 0.0
      %643 = vmatpush1.msra.mxu0 0.0
      %644 = vmatprep.subr.mxu0 0.0
      %645 = vmatpush1.msra.mxu0 0.0
      %646 = vmatprep.subr.mxu0 0.0
      %647 = vmatpush1.msra.mxu0 0.0
      %648 = vmatprep.subr.mxu0 0.0
      %649 = vmatpush1.msra.mxu0 0.0
      %650 = vmatprep.subr.mxu0 0.0
      %651 = vmatpush1.msra.mxu0 0.0
      %652 = vmatprep.subr.mxu0 0.0
      %653 = vmatpush1.msra.mxu0 0.0
      %654 = vmatprep.subr.mxu0 0.0
      %655 = vmatpush1.msra.mxu0 0.0
      %656 = vmatprep.subr.mxu0 0.0
      %657 = vmatpush1.msra.mxu0 0.0
      %658 = vmatprep.subr.mxu0 0.0
      %659 = vmatpush1.msra.mxu0 0.0
      %660 = vmatprep.subr.mxu0 0.0
      %661 = vmatpush1.msra.mxu0 0.0
      %662 = vmatprep.subr.mxu0 0.0
      %663 = vmatpush1.msra.mxu0 0.0
      %664 = vmatprep.subr.mxu0 0.0
      %665 = vmatpush1.msra.mxu0 0.0
      %666 = vmatprep.subr.mxu0 0.0
      %667 = vmatpush1.msra.mxu0 0.0
      %668 = vmatprep.subr.mxu0 0.0
      %669 = vmatpush1.msra.mxu0 0.0
      %670 = vmatprep.subr.mxu0 0.0
      %671 = vmatpush1.msra.mxu0 0.0
      %672 = vmatprep.subr.mxu0 0.0
      %673 = vmatpush1.msra.mxu0 0.0
      %674 = vmatprep.subr.mxu0 0.0
      %675 = vmatpush1.msra.mxu0 0.0
      %676 = vmatprep.subr.mxu0 0.0
      %677 = vmatpush1.msra.mxu0 0.0
      %678 = vmatprep.subr.mxu0 0.0
      %679 = vmatpush1.msra.mxu0 0.0
      %680 = vmatprep.subr.mxu0 0.0
      %681 = vmatpush1.msra.mxu0 0.0
      %682 = vmatprep.mubr.f32.mxu0 0.0
      %v683 = vand.u32 %v195, 4294901760
      %684 = vmatmul.mubr.f32.gmra.mrb[0].mxu0 %v683
      %v685 = vpop.f32.mrb[0].mxu0
      %v686 = vadd.f32 %v583, %v685
      %v687 = vpop.f32.mrb[0].mxu0
      %688 = vmatprep.mubr.f32.mxu0 0.0
      %v689 = vand.u32 %v198, 4294901760
      %690 = vmatmul.mubr.f32.gmra.mrb[0].mxu0 %v689
      %v691 = vpop.f32.mrb[0].mxu0
      %v692 = vadd.f32 %v591, %v691
      %v693 = vpop.f32.mrb[0].mxu0
      %694 = vdwg.mxu0
      %695 = vmatprep.subr.mxu0 0.0
      %v696 = vand.u32 %v185, 4294901760
      %697 = vmatpush1.msra.mxu0 %v696
      %698 = vmatprep.subr.mxu0 0.0
      %v699 = vand.u32 %v186, 4294901760
      %700 = vmatpush1.msra.mxu0 %v699
      %701 = vmatprep.subr.mxu0 0.0
      %v702 = vand.u32 %v187, 4294901760
      %703 = vmatpush1.msra.mxu0 %v702
      %704 = vmatprep.subr.mxu0 0.0
      %v705 = vand.u32 %v188, 4294901760
      %706 = vmatpush1.msra.mxu0 %v705
      %707 = vmatprep.subr.mxu0 0.0
      %v708 = vand.u32 %v189, 4294901760
      %709 = vmatpush1.msra.mxu0 %v708
      %710 = vmatprep.subr.mxu0 0.0
      %v711 = vand.u32 %v190, 4294901760
      %712 = vmatpush1.msra.mxu0 %v711
      %713 = vmatprep.subr.mxu0 0.0
      %v714 = vand.u32 %v191, 4294901760
      %715 = vmatpush1.msra.mxu0 %v714
      %716 = vmatprep.subr.mxu0 0.0
      %v717 = vand.u32 %v192, 4294901760
      %718 = vmatpush1.msra.mxu0 %v717
      %719 = vmatprep.subr.mxu0 0.0
      %720 = vmatpush1.msra.mxu0 0.0
      %721 = vmatprep.subr.mxu0 0.0
      %722 = vmatpush1.msra.mxu0 0.0
      %723 = vmatprep.subr.mxu0 0.0
      %724 = vmatpush1.msra.mxu0 0.0
      %725 = vmatprep.subr.mxu0 0.0
      %726 = vmatpush1.msra.mxu0 0.0
      %727 = vmatprep.subr.mxu0 0.0
      %728 = vmatpush1.msra.mxu0 0.0
      %729 = vmatprep.subr.mxu0 0.0
      %730 = vmatpush1.msra.mxu0 0.0
      %731 = vmatprep.subr.mxu0 0.0
      %732 = vmatpush1.msra.mxu0 0.0
      %733 = vmatprep.subr.mxu0 0.0
      %734 = vmatpush1.msra.mxu0 0.0
      %735 = vmatprep.subr.mxu0 0.0
      %736 = vmatpush1.msra.mxu0 0.0
      %737 = vmatprep.subr.mxu0 0.0
      %738 = vmatpush1.msra.mxu0 0.0
      %739 = vmatprep.subr.mxu0 0.0
      %740 = vmatpush1.msra.mxu0 0.0
      %741 = vmatprep.subr.mxu0 0.0
      %742 = vmatpush1.msra.mxu0 0.0
      %743 = vmatprep.subr.mxu0 0.0
      %744 = vmatpush1.msra.mxu0 0.0
      %745 = vmatprep.subr.mxu0 0.0
      %746 = vmatpush1.msra.mxu0 0.0
      %747 = vmatprep.subr.mxu0 0.0
      %748 = vmatpush1.msra.mxu0 0.0
      %749 = vmatprep.subr.mxu0 0.0
      %750 = vmatpush1.msra.mxu0 0.0
      %751 = vmatprep.subr.mxu0 0.0
      %752 = vmatpush1.msra.mxu0 0.0
      %753 = vmatprep.subr.mxu0 0.0
      %754 = vmatpush1.msra.mxu0 0.0
      %755 = vmatprep.subr.mxu0 0.0
      %756 = vmatpush1.msra.mxu0 0.0
      %757 = vmatprep.subr.mxu0 0.0
      %758 = vmatpush1.msra.mxu0 0.0
      %759 = vmatprep.subr.mxu0 0.0
      %760 = vmatpush1.msra.mxu0 0.0
      %761 = vmatprep.subr.mxu0 0.0
      %762 = vmatpush1.msra.mxu0 0.0
      %763 = vmatprep.subr.mxu0 0.0
      %764 = vmatpush1.msra.mxu0 0.0
      %765 = vmatprep.subr.mxu0 0.0
      %766 = vmatpush1.msra.mxu0 0.0
      %767 = vmatprep.mubr.f32.mxu0 0.0
      %v768 = vand.u32 %v195, 4294901760
      %769 = vmatmul.mubr.f32.gmra.mrb[0].mxu0 %v768
      %v770 = vpop.f32.mrb[0].mxu0
      %v771 = vadd.f32 %v686, %v770
      %v772 = vpop.f32.mrb[0].mxu0
      %773 = vmatprep.mubr.f32.mxu0 0.0
      %v774 = vand.u32 %v198, 4294901760
      %775 = vmatmul.mubr.f32.gmra.mrb[0].mxu0 %v774
      %v776 = vpop.f32.mrb[0].mxu0
      %v777 = vadd.f32 %v692, %v776
      %v778 = vpop.f32.mrb[0].mxu0
      %779 = vdwg.mxu0
      %v781 = vsel %vm193, %v172, 0
      %v784 = vsel %vm193, %v173, 0
      %786 = vmatprep.subr.mxu0 0.0
      %v787 = vand.u32 %v174, 4294901760
      %788 = vmatpush1.msra.mxu0 %v787
      %789 = vmatprep.subr.mxu0 0.0
      %v790 = vand.u32 %v175, 4294901760
      %791 = vmatpush1.msra.mxu0 %v790
      %792 = vmatprep.subr.mxu0 0.0
      %v793 = vand.u32 %v176, 4294901760
      %794 = vmatpush1.msra.mxu0 %v793
      %795 = vmatprep.subr.mxu0 0.0
      %v796 = vand.u32 %v177, 4294901760
      %797 = vmatpush1.msra.mxu0 %v796
      %798 = vmatprep.subr.mxu0 0.0
      %v799 = vand.u32 %v178, 4294901760
      %800 = vmatpush1.msra.mxu0 %v799
      %801 = vmatprep.subr.mxu0 0.0
      %v802 = vand.u32 %v179, 4294901760
      %803 = vmatpush1.msra.mxu0 %v802
      %804 = vmatprep.subr.mxu0 0.0
      %v805 = vand.u32 %v180, 4294901760
      %806 = vmatpush1.msra.mxu0 %v805
      %807 = vmatprep.subr.mxu0 0.0
      %v808 = vand.u32 %v181, 4294901760
      %809 = vmatpush1.msra.mxu0 %v808
      %810 = vmatprep.subr.mxu0 0.0
      %811 = vmatpush1.msra.mxu0 0.0
      %812 = vmatprep.subr.mxu0 0.0
      %813 = vmatpush1.msra.mxu0 0.0
      %814 = vmatprep.subr.mxu0 0.0
      %815 = vmatpush1.msra.mxu0 0.0
      %816 = vmatprep.subr.mxu0 0.0
      %817 = vmatpush1.msra.mxu0 0.0
      %818 = vmatprep.subr.mxu0 0.0
      %819 = vmatpush1.msra.mxu0 0.0
      %820 = vmatprep.subr.mxu0 0.0
      %821 = vmatpush1.msra.mxu0 0.0
      %822 = vmatprep.subr.mxu0 0.0
      %823 = vmatpush1.msra.mxu0 0.0
      %824 = vmatprep.subr.mxu0 0.0
      %825 = vmatpush1.msra.mxu0 0.0
      %826 = vmatprep.subr.mxu0 0.0
      %827 = vmatpush1.msra.mxu0 0.0
      %828 = vmatprep.subr.mxu0 0.0
      %829 = vmatpush1.msra.mxu0 0.0
      %830 = vmatprep.subr.mxu0 0.0
      %831 = vmatpush1.msra.mxu0 0.0
      %832 = vmatprep.subr.mxu0 0.0
      %833 = vmatpush1.msra.mxu0 0.0
      %834 = vmatprep.subr.mxu0 0.0
      %835 = vmatpush1.msra.mxu0 0.0
      %836 = vmatprep.subr.mxu0 0.0
      %837 = vmatpush1.msra.mxu0 0.0
      %838 = vmatprep.subr.mxu0 0.0
      %839 = vmatpush1.msra.mxu0 0.0
      %840 = vmatprep.subr.mxu0 0.0
      %841 = vmatpush1.msra.mxu0 0.0
      %842 = vmatprep.subr.mxu0 0.0
      %843 = vmatpush1.msra.mxu0 0.0
      %844 = vmatprep.subr.mxu0 0.0
      %845 = vmatpush1.msra.mxu0 0.0
      %846 = vmatprep.subr.mxu0 0.0
      %847 = vmatpush1.msra.mxu0 0.0
      %848 = vmatprep.subr.mxu0 0.0
      %849 = vmatpush1.msra.mxu0 0.0
      %850 = vmatprep.subr.mxu0 0.0
      %851 = vmatpush1.msra.mxu0 0.0
      %852 = vmatprep.subr.mxu0 0.0
      %853 = vmatpush1.msra.mxu0 0.0
      %854 = vmatprep.subr.mxu0 0.0
      %855 = vmatpush1.msra.mxu0 0.0
      %856 = vmatprep.subr.mxu0 0.0
      %857 = vmatpush1.msra.mxu0 0.0
      %858 = vmatprep.mubr.f32.mxu0 0.0
      %v859 = vand.u32 %v781, 4294901760
      %v860 = vsub.f32 %v781, %v859
      %v861 = vand.u32 %v860, 4294901760
      %v862 = vsub.f32 %v860, %v861
      %v863 = vand.u32 %v862, 4294901760
      %864 = vmatmul.mubr.f32.gmra.mrb[0].mxu0 %v863
      %v865 = vpop.f32.mrb[0].mxu0
      %v866 = vadd.f32 %v771, %v865
      %v867 = vpop.f32.mrb[0].mxu0
      %868 = vmatprep.mubr.f32.mxu0 0.0
      %v869 = vand.u32 %v784, 4294901760
      %v870 = vsub.f32 %v784, %v869
      %v871 = vand.u32 %v870, 4294901760
      %v872 = vsub.f32 %v870, %v871
      %v873 = vand.u32 %v872, 4294901760
      %874 = vmatmul.mubr.f32.gmra.mrb[0].mxu0 %v873
      %v875 = vpop.f32.mrb[0].mxu0
      %v876 = vadd.f32 %v777, %v875
      %v877 = vpop.f32.mrb[0].mxu0
      %878 = vdwg.mxu0
      %879 = vmatprep.subr.mxu0 0.0
      %v880 = vand.u32 %v174, 4294901760
      %v881 = vsub.f32 %v174, %v880
      %v882 = vand.u32 %v881, 4294901760
      %v883 = vsub.f32 %v881, %v882
      %v884 = vand.u32 %v883, 4294901760
      %885 = vmatpush1.msra.mxu0 %v884
      %886 = vmatprep.subr.mxu0 0.0
      %v887 = vand.u32 %v175, 4294901760
      %v888 = vsub.f32 %v175, %v887
      %v889 = vand.u32 %v888, 4294901760
      %v890 = vsub.f32 %v888, %v889
      %v891 = vand.u32 %v890, 4294901760
      %892 = vmatpush1.msra.mxu0 %v891
      %893 = vmatprep.subr.mxu0 0.0
      %v894 = vand.u32 %v176, 4294901760
      %v895 = vsub.f32 %v176, %v894
      %v896 = vand.u32 %v895, 4294901760
      %v897 = vsub.f32 %v895, %v896
      %v898 = vand.u32 %v897, 4294901760
      %899 = vmatpush1.msra.mxu0 %v898
      %900 = vmatprep.subr.mxu0 0.0
      %v901 = vand.u32 %v177, 4294901760
      %v902 = vsub.f32 %v177, %v901
      %v903 = vand.u32 %v902, 4294901760
      %v904 = vsub.f32 %v902, %v903
      %v905 = vand.u32 %v904, 4294901760
      %906 = vmatpush1.msra.mxu0 %v905
      %907 = vmatprep.subr.mxu0 0.0
      %v908 = vand.u32 %v178, 4294901760
      %v909 = vsub.f32 %v178, %v908
      %v910 = vand.u32 %v909, 4294901760
      %v911 = vsub.f32 %v909, %v910
      %v912 = vand.u32 %v911, 4294901760
      %913 = vmatpush1.msra.mxu0 %v912
      %914 = vmatprep.subr.mxu0 0.0
      %v915 = vand.u32 %v179, 4294901760
      %v916 = vsub.f32 %v179, %v915
      %v917 = vand.u32 %v916, 4294901760
      %v918 = vsub.f32 %v916, %v917
      %v919 = vand.u32 %v918, 4294901760
      %920 = vmatpush1.msra.mxu0 %v919
      %921 = vmatprep.subr.mxu0 0.0
      %v922 = vand.u32 %v180, 4294901760
      %v923 = vsub.f32 %v180, %v922
      %v924 = vand.u32 %v923, 4294901760
      %v925 = vsub.f32 %v923, %v924
      %v926 = vand.u32 %v925, 4294901760
      %927 = vmatpush1.msra.mxu0 %v926
      %928 = vmatprep.subr.mxu0 0.0
      %v929 = vand.u32 %v181, 4294901760
      %v930 = vsub.f32 %v181, %v929
      %v931 = vand.u32 %v930, 4294901760
      %v932 = vsub.f32 %v930, %v931
      %v933 = vand.u32 %v932, 4294901760
      %934 = vmatpush1.msra.mxu0 %v933
      %935 = vmatprep.subr.mxu0 0.0
      %936 = vmatpush1.msra.mxu0 0.0
      %937 = vmatprep.subr.mxu0 0.0
      %938 = vmatpush1.msra.mxu0 0.0
      %939 = vmatprep.subr.mxu0 0.0
      %940 = vmatpush1.msra.mxu0 0.0
      %941 = vmatprep.subr.mxu0 0.0
      %942 = vmatpush1.msra.mxu0 0.0
      %943 = vmatprep.subr.mxu0 0.0
      %944 = vmatpush1.msra.mxu0 0.0
      %945 = vmatprep.subr.mxu0 0.0
      %946 = vmatpush1.msra.mxu0 0.0
      %947 = vmatprep.subr.mxu0 0.0
      %948 = vmatpush1.msra.mxu0 0.0
      %949 = vmatprep.subr.mxu0 0.0
      %950 = vmatpush1.msra.mxu0 0.0
      %951 = vmatprep.subr.mxu0 0.0
      %952 = vmatpush1.msra.mxu0 0.0
      %953 = vmatprep.subr.mxu0 0.0
      %954 = vmatpush1.msra.mxu0 0.0
      %955 = vmatprep.subr.mxu0 0.0
      %956 = vmatpush1.msra.mxu0 0.0
      %957 = vmatprep.subr.mxu0 0.0
      %958 = vmatpush1.msra.mxu0 0.0
      %959 = vmatprep.subr.mxu0 0.0
      %960 = vmatpush1.msra.mxu0 0.0
      %961 = vmatprep.subr.mxu0 0.0
      %962 = vmatpush1.msra.mxu0 0.0
      %963 = vmatprep.subr.mxu0 0.0
      %964 = vmatpush1.msra.mxu0 0.0
      %965 = vmatprep.subr.mxu0 0.0
      %966 = vmatpush1.msra.mxu0 0.0
      %967 = vmatprep.subr.mxu0 0.0
      %968 = vmatpush1.msra.mxu0 0.0
      %969 = vmatprep.subr.mxu0 0.0
      %970 = vmatpush1.msra.mxu0 0.0
      %971 = vmatprep.subr.mxu0 0.0
      %972 = vmatpush1.msra.mxu0 0.0
      %973 = vmatprep.subr.mxu0 0.0
      %974 = vmatpush1.msra.mxu0 0.0
      %975 = vmatprep.subr.mxu0 0.0
      %976 = vmatpush1.msra.mxu0 0.0
      %977 = vmatprep.subr.mxu0 0.0
      %978 = vmatpush1.msra.mxu0 0.0
      %979 = vmatprep.subr.mxu0 0.0
      %980 = vmatpush1.msra.mxu0 0.0
      %981 = vmatprep.subr.mxu0 0.0
      %982 = vmatpush1.msra.mxu0 0.0
      %983 = vmatprep.mubr.f32.mxu0 0.0
      %v984 = vand.u32 %v781, 4294901760
      %985 = vmatmul.mubr.f32.gmra.mrb[0].mxu0 %v984
      %v986 = vpop.f32.mrb[0].mxu0
      %v987 = vadd.f32 %v866, %v986
      %v988 = vpop.f32.mrb[0].mxu0
      %989 = vmatprep.mubr.f32.mxu0 0.0
      %v990 = vand.u32 %v784, 4294901760
      %991 = vmatmul.mubr.f32.gmra.mrb[0].mxu0 %v990
      %v992 = vpop.f32.mrb[0].mxu0
      %v993 = vadd.f32 %v876, %v992
      %v994 = vpop.f32.mrb[0].mxu0
      %995 = vdwg.mxu0
      %996 = vmatprep.subr.mxu0 0.0
      %v997 = vand.u32 %v174, 4294901760
      %v998 = vsub.f32 %v174, %v997
      %999 = vmatpush1.msra.mxu0 %v998
      %1000 = vmatprep.subr.mxu0 0.0
      %v1001 = vand.u32 %v175, 4294901760
      %v1002 = vsub.f32 %v175, %v1001
      %1003 = vmatpush1.msra.mxu0 %v1002
      %1004 = vmatprep.subr.mxu0 0.0
      %v1005 = vand.u32 %v176, 4294901760
      %v1006 = vsub.f32 %v176, %v1005
      %1007 = vmatpush1.msra.mxu0 %v1006
      %1008 = vmatprep.subr.mxu0 0.0
      %v1009 = vand.u32 %v177, 4294901760
      %v1010 = vsub.f32 %v177, %v1009
      %1011 = vmatpush1.msra.mxu0 %v1010
      %1012 = vmatprep.subr.mxu0 0.0
      %v1013 = vand.u32 %v178, 4294901760
      %v1014 = vsub.f32 %v178, %v1013
      %1015 = vmatpush1.msra.mxu0 %v1014
      %1016 = vmatprep.subr.mxu0 0.0
      %v1017 = vand.u32 %v179, 4294901760
      %v1018 = vsub.f32 %v179, %v1017
      %1019 = vmatpush1.msra.mxu0 %v1018
      %1020 = vmatprep.subr.mxu0 0.0
      %v1021 = vand.u32 %v180, 4294901760
      %v1022 = vsub.f32 %v180, %v1021
      %1023 = vmatpush1.msra.mxu0 %v1022
      %1024 = vmatprep.subr.mxu0 0.0
      %v1025 = vand.u32 %v181, 4294901760
      %v1026 = vsub.f32 %v181, %v1025
      %1027 = vmatpush1.msra.mxu0 %v1026
      %1028 = vmatprep.subr.mxu0 0.0
      %1029 = vmatpush1.msra.mxu0 0.0
      %1030 = vmatprep.subr.mxu0 0.0
      %1031 = vmatpush1.msra.mxu0 0.0
      %1032 = vmatprep.subr.mxu0 0.0
      %1033 = vmatpush1.msra.mxu0 0.0
      %1034 = vmatprep.subr.mxu0 0.0
      %1035 = vmatpush1.msra.mxu0 0.0
      %1036 = vmatprep.subr.mxu0 0.0
      %1037 = vmatpush1.msra.mxu0 0.0
      %1038 = vmatprep.subr.mxu0 0.0
      %1039 = vmatpush1.msra.mxu0 0.0
      %1040 = vmatprep.subr.mxu0 0.0
      %1041 = vmatpush1.msra.mxu0 0.0
      %1042 = vmatprep.subr.mxu0 0.0
      %1043 = vmatpush1.msra.mxu0 0.0
      %1044 = vmatprep.subr.mxu0 0.0
      %1045 = vmatpush1.msra.mxu0 0.0
      %1046 = vmatprep.subr.mxu0 0.0
      %1047 = vmatpush1.msra.mxu0 0.0
      %1048 = vmatprep.subr.mxu0 0.0
      %1049 = vmatpush1.msra.mxu0 0.0
      %1050 = vmatprep.subr.mxu0 0.0
      %1051 = vmatpush1.msra.mxu0 0.0
      %1052 = vmatprep.subr.mxu0 0.0
      %1053 = vmatpush1.msra.mxu0 0.0
      %1054 = vmatprep.subr.mxu0 0.0
      %1055 = vmatpush1.msra.mxu0 0.0
      %1056 = vmatprep.subr.mxu0 0.0
      %1057 = vmatpush1.msra.mxu0 0.0
      %1058 = vmatprep.subr.mxu0 0.0
      %1059 = vmatpush1.msra.mxu0 0.0
      %1060 = vmatprep.subr.mxu0 0.0
      %1061 = vmatpush1.msra.mxu0 0.0
      %1062 = vmatprep.subr.mxu0 0.0
      %1063 = vmatpush1.msra.mxu0 0.0
      %1064 = vmatprep.subr.mxu0 0.0
      %1065 = vmatpush1.msra.mxu0 0.0
      %1066 = vmatprep.subr.mxu0 0.0
      %1067 = vmatpush1.msra.mxu0 0.0
      %1068 = vmatprep.subr.mxu0 0.0
      %1069 = vmatpush1.msra.mxu0 0.0
      %1070 = vmatprep.subr.mxu0 0.0
      %1071 = vmatpush1.msra.mxu0 0.0
      %1072 = vmatprep.subr.mxu0 0.0
      %1073 = vmatpush1.msra.mxu0 0.0
      %1074 = vmatprep.subr.mxu0 0.0
      %1075 = vmatpush1.msra.mxu0 0.0
      %1076 = vmatprep.mubr.f32.mxu0 0.0
      %v1077 = vand.u32 %v781, 4294901760
      %v1078 = vsub.f32 %v781, %v1077
      %1079 = vmatmul.mubr.f32.gmra.mrb[0].mxu0 %v1078
      %v1080 = vpop.f32.mrb[0].mxu0
      %v1081 = vadd.f32 %v987, %v1080
      %v1082 = vpop.f32.mrb[0].mxu0
      %1083 = vmatprep.mubr.f32.mxu0 0.0
      %v1084 = vand.u32 %v784, 4294901760
      %v1085 = vsub.f32 %v784, %v1084
      %1086 = vmatmul.mubr.f32.gmra.mrb[0].mxu0 %v1085
      %v1087 = vpop.f32.mrb[0].mxu0
      %v1088 = vadd.f32 %v993, %v1087
      %v1089 = vpop.f32.mrb[0].mxu0
      %1090 = vdwg.mxu0
      %1091 = vmatprep.subr.mxu0 0.0
      %v1092 = vand.u32 %v174, 4294901760
      %1093 = vmatpush1.msra.mxu0 %v1092
      %1094 = vmatprep.subr.mxu0 0.0
      %v1095 = vand.u32 %v175, 4294901760
      %1096 = vmatpush1.msra.mxu0 %v1095
      %1097 = vmatprep.subr.mxu0 0.0
      %v1098 = vand.u32 %v176, 4294901760
      %1099 = vmatpush1.msra.mxu0 %v1098
      %1100 = vmatprep.subr.mxu0 0.0
      %v1101 = vand.u32 %v177, 4294901760
      %1102 = vmatpush1.msra.mxu0 %v1101
      %1103 = vmatprep.subr.mxu0 0.0
      %v1104 = vand.u32 %v178, 4294901760
      %1105 = vmatpush1.msra.mxu0 %v1104
      %1106 = vmatprep.subr.mxu0 0.0
      %v1107 = vand.u32 %v179, 4294901760
      %1108 = vmatpush1.msra.mxu0 %v1107
      %1109 = vmatprep.subr.mxu0 0.0
      %v1110 = vand.u32 %v180, 4294901760
      %1111 = vmatpush1.msra.mxu0 %v1110
      %1112 = vmatprep.subr.mxu0 0.0
      %v1113 = vand.u32 %v181, 4294901760
      %1114 = vmatpush1.msra.mxu0 %v1113
      %1115 = vmatprep.subr.mxu0 0.0
      %1116 = vmatpush1.msra.mxu0 0.0
      %1117 = vmatprep.subr.mxu0 0.0
      %1118 = vmatpush1.msra.mxu0 0.0
      %1119 = vmatprep.subr.mxu0 0.0
      %1120 = vmatpush1.msra.mxu0 0.0
      %1121 = vmatprep.subr.mxu0 0.0
      %1122 = vmatpush1.msra.mxu0 0.0
      %1123 = vmatprep.subr.mxu0 0.0
      %1124 = vmatpush1.msra.mxu0 0.0
      %1125 = vmatprep.subr.mxu0 0.0
      %1126 = vmatpush1.msra.mxu0 0.0
      %1127 = vmatprep.subr.mxu0 0.0
      %1128 = vmatpush1.msra.mxu0 0.0
      %1129 = vmatprep.subr.mxu0 0.0
      %1130 = vmatpush1.msra.mxu0 0.0
      %1131 = vmatprep.subr.mxu0 0.0
      %1132 = vmatpush1.msra.mxu0 0.0
      %1133 = vmatprep.subr.mxu0 0.0
      %1134 = vmatpush1.msra.mxu0 0.0
      %1135 = vmatprep.subr.mxu0 0.0
      %1136 = vmatpush1.msra.mxu0 0.0
      %1137 = vmatprep.subr.mxu0 0.0
      %1138 = vmatpush1.msra.mxu0 0.0
      %1139 = vmatprep.subr.mxu0 0.0
      %1140 = vmatpush1.msra.mxu0 0.0
      %1141 = vmatprep.subr.mxu0 0.0
      %1142 = vmatpush1.msra.mxu0 0.0
      %1143 = vmatprep.subr.mxu0 0.0
      %1144 = vmatpush1.msra.mxu0 0.0
      %1145 = vmatprep.subr.mxu0 0.0
      %1146 = vmatpush1.msra.mxu0 0.0
      %1147 = vmatprep.subr.mxu0 0.0
      %1148 = vmatpush1.msra.mxu0 0.0
      %1149 = vmatprep.subr.mxu0 0.0
      %1150 = vmatpush1.msra.mxu0 0.0
      %1151 = vmatprep.subr.mxu0 0.0
      %1152 = vmatpush1.msra.mxu0 0.0
      %1153 = vmatprep.subr.mxu0 0.0
      %1154 = vmatpush1.msra.mxu0 0.0
      %1155 = vmatprep.subr.mxu0 0.0
      %1156 = vmatpush1.msra.mxu0 0.0
      %1157 = vmatprep.subr.mxu0 0.0
      %1158 = vmatpush1.msra.mxu0 0.0
      %1159 = vmatprep.subr.mxu0 0.0
      %1160 = vmatpush1.msra.mxu0 0.0
      %1161 = vmatprep.subr.mxu0 0.0
      %1162 = vmatpush1.msra.mxu0 0.0
      %1163 = vmatprep.mubr.f32.mxu0 0.0
      %v1164 = vand.u32 %v781, 4294901760
      %v1165 = vsub.f32 %v781, %v1164
      %v1166 = vand.u32 %v1165, 4294901760
      %1167 = vmatmul.mubr.f32.gmra.mrb[0].mxu0 %v1166
      %v1168 = vpop.f32.mrb[0].mxu0
      %v1169 = vadd.f32 %v1081, %v1168
      %v1170 = vpop.f32.mrb[0].mxu0
      %1171 = vmatprep.mubr.f32.mxu0 0.0
      %v1172 = vand.u32 %v784, 4294901760
      %v1173 = vsub.f32 %v784, %v1172
      %v1174 = vand.u32 %v1173, 4294901760
      %1175 = vmatmul.mubr.f32.gmra.mrb[0].mxu0 %v1174
      %v1176 = vpop.f32.mrb[0].mxu0
      %v1177 = vadd.f32 %v1088, %v1176
      %v1178 = vpop.f32.mrb[0].mxu0
      %1179 = vdwg.mxu0
      %1180 = vmatprep.subr.mxu0 0.0
      %v1181 = vand.u32 %v174, 4294901760
      %v1182 = vsub.f32 %v174, %v1181
      %v1183 = vand.u32 %v1182, 4294901760
      %1184 = vmatpush1.msra.mxu0 %v1183
      %1185 = vmatprep.subr.mxu0 0.0
      %v1186 = vand.u32 %v175, 4294901760
      %v1187 = vsub.f32 %v175, %v1186
      %v1188 = vand.u32 %v1187, 4294901760
      %1189 = vmatpush1.msra.mxu0 %v1188
      %1190 = vmatprep.subr.mxu0 0.0
      %v1191 = vand.u32 %v176, 4294901760
      %v1192 = vsub.f32 %v176, %v1191
      %v1193 = vand.u32 %v1192, 4294901760
      %1194 = vmatpush1.msra.mxu0 %v1193
      %1195 = vmatprep.subr.mxu0 0.0
      %v1196 = vand.u32 %v177, 4294901760
      %v1197 = vsub.f32 %v177, %v1196
      %v1198 = vand.u32 %v1197, 4294901760
      %1199 = vmatpush1.msra.mxu0 %v1198
      %1200 = vmatprep.subr.mxu0 0.0
      %v1201 = vand.u32 %v178, 4294901760
      %v1202 = vsub.f32 %v178, %v1201
      %v1203 = vand.u32 %v1202, 4294901760
      %1204 = vmatpush1.msra.mxu0 %v1203
      %1205 = vmatprep.subr.mxu0 0.0
      %v1206 = vand.u32 %v179, 4294901760
      %v1207 = vsub.f32 %v179, %v1206
      %v1208 = vand.u32 %v1207, 4294901760
      %1209 = vmatpush1.msra.mxu0 %v1208
      %1210 = vmatprep.subr.mxu0 0.0
      %v1211 = vand.u32 %v180, 4294901760
      %v1212 = vsub.f32 %v180, %v1211
      %v1213 = vand.u32 %v1212, 4294901760
      %1214 = vmatpush1.msra.mxu0 %v1213
      %1215 = vmatprep.subr.mxu0 0.0
      %v1216 = vand.u32 %v181, 4294901760
      %v1217 = vsub.f32 %v181, %v1216
      %v1218 = vand.u32 %v1217, 4294901760
      %1219 = vmatpush1.msra.mxu0 %v1218
      %1220 = vmatprep.subr.mxu0 0.0
      %1221 = vmatpush1.msra.mxu0 0.0
      %1222 = vmatprep.subr.mxu0 0.0
      %1223 = vmatpush1.msra.mxu0 0.0
      %1224 = vmatprep.subr.mxu0 0.0
      %1225 = vmatpush1.msra.mxu0 0.0
      %1226 = vmatprep.subr.mxu0 0.0
      %1227 = vmatpush1.msra.mxu0 0.0
      %1228 = vmatprep.subr.mxu0 0.0
      %1229 = vmatpush1.msra.mxu0 0.0
      %1230 = vmatprep.subr.mxu0 0.0
      %1231 = vmatpush1.msra.mxu0 0.0
      %1232 = vmatprep.subr.mxu0 0.0
      %1233 = vmatpush1.msra.mxu0 0.0
      %1234 = vmatprep.subr.mxu0 0.0
      %1235 = vmatpush1.msra.mxu0 0.0
      %1236 = vmatprep.subr.mxu0 0.0
      %1237 = vmatpush1.msra.mxu0 0.0
      %1238 = vmatprep.subr.mxu0 0.0
      %1239 = vmatpush1.msra.mxu0 0.0
      %1240 = vmatprep.subr.mxu0 0.0
      %1241 = vmatpush1.msra.mxu0 0.0
      %1242 = vmatprep.subr.mxu0 0.0
      %1243 = vmatpush1.msra.mxu0 0.0
      %1244 = vmatprep.subr.mxu0 0.0
      %1245 = vmatpush1.msra.mxu0 0.0
      %1246 = vmatprep.subr.mxu0 0.0
      %1247 = vmatpush1.msra.mxu0 0.0
      %1248 = vmatprep.subr.mxu0 0.0
      %1249 = vmatpush1.msra.mxu0 0.0
      %1250 = vmatprep.subr.mxu0 0.0
      %1251 = vmatpush1.msra.mxu0 0.0
      %1252 = vmatprep.subr.mxu0 0.0
      %1253 = vmatpush1.msra.mxu0 0.0
      %1254 = vmatprep.subr.mxu0 0.0
      %1255 = vmatpush1.msra.mxu0 0.0
      %1256 = vmatprep.subr.mxu0 0.0
      %1257 = vmatpush1.msra.mxu0 0.0
      %1258 = vmatprep.subr.mxu0 0.0
      %1259 = vmatpush1.msra.mxu0 0.0
      %1260 = vmatprep.subr.mxu0 0.0
      %1261 = vmatpush1.msra.mxu0 0.0
      %1262 = vmatprep.subr.mxu0 0.0
      %1263 = vmatpush1.msra.mxu0 0.0
      %1264 = vmatprep.subr.mxu0 0.0
      %1265 = vmatpush1.msra.mxu0 0.0
      %1266 = vmatprep.subr.mxu0 0.0
      %1267 = vmatpush1.msra.mxu0 0.0
      %1268 = vmatprep.mubr.f32.mxu0 0.0
      %v1269 = vand.u32 %v781, 4294901760
      %1270 = vmatmul.mubr.f32.gmra.mrb[0].mxu0 %v1269
      %v1271 = vpop.f32.mrb[0].mxu0
      %v1272 = vadd.f32 %v1169, %v1271
      %v1273 = vpop.f32.mrb[0].mxu0
      %1274 = vmatprep.mubr.f32.mxu0 0.0
      %v1275 = vand.u32 %v784, 4294901760
      %1276 = vmatmul.mubr.f32.gmra.mrb[0].mxu0 %v1275
      %v1277 = vpop.f32.mrb[0].mxu0
      %v1278 = vadd.f32 %v1177, %v1277
      %v1279 = vpop.f32.mrb[0].mxu0
      %1280 = vdwg.mxu0
      %1281 = vmatprep.subr.mxu0 0.0
      %v1282 = vand.u32 %v174, 4294901760
      %1283 = vmatpush1.msra.mxu0 %v1282
      %1284 = vmatprep.subr.mxu0 0.0
      %v1285 = vand.u32 %v175, 4294901760
      %1286 = vmatpush1.msra.mxu0 %v1285
      %1287 = vmatprep.subr.mxu0 0.0
      %v1288 = vand.u32 %v176, 4294901760
      %1289 = vmatpush1.msra.mxu0 %v1288
      %1290 = vmatprep.subr.mxu0 0.0
      %v1291 = vand.u32 %v177, 4294901760
      %1292 = vmatpush1.msra.mxu0 %v1291
      %1293 = vmatprep.subr.mxu0 0.0
      %v1294 = vand.u32 %v178, 4294901760
      %1295 = vmatpush1.msra.mxu0 %v1294
      %1296 = vmatprep.subr.mxu0 0.0
      %v1297 = vand.u32 %v179, 4294901760
      %1298 = vmatpush1.msra.mxu0 %v1297
      %1299 = vmatprep.subr.mxu0 0.0
      %v1300 = vand.u32 %v180, 4294901760
      %1301 = vmatpush1.msra.mxu0 %v1300
      %1302 = vmatprep.subr.mxu0 0.0
      %v1303 = vand.u32 %v181, 4294901760
      %1304 = vmatpush1.msra.mxu0 %v1303
      %1305 = vmatprep.subr.mxu0 0.0
      %1306 = vmatpush1.msra.mxu0 0.0
      %1307 = vmatprep.subr.mxu0 0.0
      %1308 = vmatpush1.msra.mxu0 0.0
      %1309 = vmatprep.subr.mxu0 0.0
      %1310 = vmatpush1.msra.mxu0 0.0
      %1311 = vmatprep.subr.mxu0 0.0
      %1312 = vmatpush1.msra.mxu0 0.0
      %1313 = vmatprep.subr.mxu0 0.0
      %1314 = vmatpush1.msra.mxu0 0.0
      %1315 = vmatprep.subr.mxu0 0.0
      %1316 = vmatpush1.msra.mxu0 0.0
      %1317 = vmatprep.subr.mxu0 0.0
      %1318 = vmatpush1.msra.mxu0 0.0
      %1319 = vmatprep.subr.mxu0 0.0
      %1320 = vmatpush1.msra.mxu0 0.0
      %1321 = vmatprep.subr.mxu0 0.0
      %1322 = vmatpush1.msra.mxu0 0.0
      %1323 = vmatprep.subr.mxu0 0.0
      %1324 = vmatpush1.msra.mxu0 0.0
      %1325 = vmatprep.subr.mxu0 0.0
      %1326 = vmatpush1.msra.mxu0 0.0
      %1327 = vmatprep.subr.mxu0 0.0
      %1328 = vmatpush1.msra.mxu0 0.0
      %1329 = vmatprep.subr.mxu0 0.0
      %1330 = vmatpush1.msra.mxu0 0.0
      %1331 = vmatprep.subr.mxu0 0.0
      %1332 = vmatpush1.msra.mxu0 0.0
      %1333 = vmatprep.subr.mxu0 0.0
      %1334 = vmatpush1.msra.mxu0 0.0
      %1335 = vmatprep.subr.mxu0 0.0
      %1336 = vmatpush1.msra.mxu0 0.0
      %1337 = vmatprep.subr.mxu0 0.0
      %1338 = vmatpush1.msra.mxu0 0.0
      %1339 = vmatprep.subr.mxu0 0.0
      %1340 = vmatpush1.msra.mxu0 0.0
      %1341 = vmatprep.subr.mxu0 0.0
      %1342 = vmatpush1.msra.mxu0 0.0
      %1343 = vmatprep.subr.mxu0 0.0
      %1344 = vmatpush1.msra.mxu0 0.0
      %1345 = vmatprep.subr.mxu0 0.0
      %1346 = vmatpush1.msra.mxu0 0.0
      %1347 = vmatprep.subr.mxu0 0.0
      %1348 = vmatpush1.msra.mxu0 0.0
      %1349 = vmatprep.subr.mxu0 0.0
      %1350 = vmatpush1.msra.mxu0 0.0
      %1351 = vmatprep.subr.mxu0 0.0
      %1352 = vmatpush1.msra.mxu0 0.0
      %1353 = vmatprep.mubr.f32.mxu0 0.0
      %v1354 = vand.u32 %v781, 4294901760
      %1355 = vmatmul.mubr.f32.gmra.mrb[0].mxu0 %v1354
      %v1356 = vpop.f32.mrb[0].mxu0
      %v1357 = vadd.f32 %v1272, %v1356
      %v1358 = vpop.f32.mrb[0].mxu0
      %1359 = vmatprep.mubr.f32.mxu0 0.0
      %v1360 = vand.u32 %v784, 4294901760
      %1361 = vmatmul.mubr.f32.gmra.mrb[0].mxu0 %v1360
      %v1362 = vpop.f32.mrb[0].mxu0
      %v1363 = vadd.f32 %v1278, %v1362
      %v1364 = vpop.f32.mrb[0].mxu0
      %1365 = vdwg.mxu0
      %v1366 = vld [vmem:[%s165 + $0x2] sm:$0xff]
      %v1367 = vld [vmem:[%s165 + $0xa] sm:$0xff]
      %s1368 = scalar_lea.vmem %s1, 128
      %v1369 = vld [vmem:[%s1368] sm:$0xff]
      %v1370 = vld [vmem:[%s1368 + $0x8] sm:$0xff]
      %v1371 = vld [vmem:[%s1368 + $0x10] sm:$0xff]
      %v1372 = vld [vmem:[%s1368 + $0x18] sm:$0xff]
      %v1373 = vld [vmem:[%s1368 + $0x20] sm:$0xff]
      %v1374 = vld [vmem:[%s1368 + $0x28] sm:$0xff]
      %v1375 = vld [vmem:[%s1368 + $0x30] sm:$0xff]
      %v1376 = vld [vmem:[%s1368 + $0x38] sm:$0xff]
      %v1378 = vsel %vm193, %v1366, 0
      %v1381 = vsel %vm193, %v1367, 0
      %1383 = vmatprep.subr.mxu0 0.0
      %v1384 = vand.u32 %v1369, 4294901760
      %1385 = vmatpush1.msra.mxu0 %v1384
      %1386 = vmatprep.subr.mxu0 0.0
      %v1387 = vand.u32 %v1370, 4294901760
      %1388 = vmatpush1.msra.mxu0 %v1387
      %1389 = vmatprep.subr.mxu0 0.0
      %v1390 = vand.u32 %v1371, 4294901760
      %1391 = vmatpush1.msra.mxu0 %v1390
      %1392 = vmatprep.subr.mxu0 0.0
      %v1393 = vand.u32 %v1372, 4294901760
      %1394 = vmatpush1.msra.mxu0 %v1393
      %1395 = vmatprep.subr.mxu0 0.0
      %v1396 = vand.u32 %v1373, 4294901760
      %1397 = vmatpush1.msra.mxu0 %v1396
      %1398 = vmatprep.subr.mxu0 0.0
      %v1399 = vand.u32 %v1374, 4294901760
      %1400 = vmatpush1.msra.mxu0 %v1399
      %1401 = vmatprep.subr.mxu0 0.0
      %v1402 = vand.u32 %v1375, 4294901760
      %1403 = vmatpush1.msra.mxu0 %v1402
      %1404 = vmatprep.subr.mxu0 0.0
      %v1405 = vand.u32 %v1376, 4294901760
      %1406 = vmatpush1.msra.mxu0 %v1405
      %1407 = vmatprep.subr.mxu0 0.0
      %1408 = vmatpush1.msra.mxu0 0.0
      %1409 = vmatprep.subr.mxu0 0.0
      %1410 = vmatpush1.msra.mxu0 0.0
      %1411 = vmatprep.subr.mxu0 0.0
      %1412 = vmatpush1.msra.mxu0 0.0
      %1413 = vmatprep.subr.mxu0 0.0
      %1414 = vmatpush1.msra.mxu0 0.0
      %1415 = vmatprep.subr.mxu0 0.0
      %1416 = vmatpush1.msra.mxu0 0.0
      %1417 = vmatprep.subr.mxu0 0.0
      %1418 = vmatpush1.msra.mxu0 0.0
      %1419 = vmatprep.subr.mxu0 0.0
      %1420 = vmatpush1.msra.mxu0 0.0
      %1421 = vmatprep.subr.mxu0 0.0
      %1422 = vmatpush1.msra.mxu0 0.0
      %1423 = vmatprep.subr.mxu0 0.0
      %1424 = vmatpush1.msra.mxu0 0.0
      %1425 = vmatprep.subr.mxu0 0.0
      %1426 = vmatpush1.msra.mxu0 0.0
      %1427 = vmatprep.subr.mxu0 0.0
      %1428 = vmatpush1.msra.mxu0 0.0
      %1429 = vmatprep.subr.mxu0 0.0
      %1430 = vmatpush1.msra.mxu0 0.0
      %1431 = vmatprep.subr.mxu0 0.0
      %1432 = vmatpush1.msra.mxu0 0.0
      %1433 = vmatprep.subr.mxu0 0.0
      %1434 = vmatpush1.msra.mxu0 0.0
      %1435 = vmatprep.subr.mxu0 0.0
      %1436 = vmatpush1.msra.mxu0 0.0
      %1437 = vmatprep.subr.mxu0 0.0
      %1438 = vmatpush1.msra.mxu0 0.0
      %1439 = vmatprep.subr.mxu0 0.0
      %1440 = vmatpush1.msra.mxu0 0.0
      %1441 = vmatprep.subr.mxu0 0.0
      %1442 = vmatpush1.msra.mxu0 0.0
      %1443 = vmatprep.subr.mxu0 0.0
      %1444 = vmatpush1.msra.mxu0 0.0
      %1445 = vmatprep.subr.mxu0 0.0
      %1446 = vmatpush1.msra.mxu0 0.0
      %1447 = vmatprep.subr.mxu0 0.0
      %1448 = vmatpush1.msra.mxu0 0.0
      %1449 = vmatprep.subr.mxu0 0.0
      %1450 = vmatpush1.msra.mxu0 0.0
      %1451 = vmatprep.subr.mxu0 0.0
      %1452 = vmatpush1.msra.mxu0 0.0
      %1453 = vmatprep.subr.mxu0 0.0
      %1454 = vmatpush1.msra.mxu0 0.0
      %1455 = vmatprep.mubr.f32.mxu0 0.0
      %v1456 = vand.u32 %v1378, 4294901760
      %v1457 = vsub.f32 %v1378, %v1456
      %v1458 = vand.u32 %v1457, 4294901760
      %v1459 = vsub.f32 %v1457, %v1458
      %v1460 = vand.u32 %v1459, 4294901760
      %1461 = vmatmul.mubr.f32.gmra.mrb[0].mxu0 %v1460
      %v1462 = vpop.f32.mrb[0].mxu0
      %v1463 = vadd.f32 0.0, %v1462
      %v1464 = vpop.f32.mrb[0].mxu0
      %1465 = vmatprep.mubr.f32.mxu0 0.0
      %v1466 = vand.u32 %v1381, 4294901760
      %v1467 = vsub.f32 %v1381, %v1466
      %v1468 = vand.u32 %v1467, 4294901760
      %v1469 = vsub.f32 %v1467, %v1468
      %v1470 = vand.u32 %v1469, 4294901760
      %1471 = vmatmul.mubr.f32.gmra.mrb[0].mxu0 %v1470
      %v1472 = vpop.f32.mrb[0].mxu0
      %v1473 = vadd.f32 0.0, %v1472
      %v1474 = vpop.f32.mrb[0].mxu0
      %1475 = vdwg.mxu0
      %1476 = vmatprep.subr.mxu0 0.0
      %v1477 = vand.u32 %v1369, 4294901760
      %v1478 = vsub.f32 %v1369, %v1477
      %v1479 = vand.u32 %v1478, 4294901760
      %v1480 = vsub.f32 %v1478, %v1479
      %v1481 = vand.u32 %v1480, 4294901760
      %1482 = vmatpush1.msra.mxu0 %v1481
      %1483 = vmatprep.subr.mxu0 0.0
      %v1484 = vand.u32 %v1370, 4294901760
      %v1485 = vsub.f32 %v1370, %v1484
      %v1486 = vand.u32 %v1485, 4294901760
      %v1487 = vsub.f32 %v1485, %v1486
      %v1488 = vand.u32 %v1487, 4294901760
      %1489 = vmatpush1.msra.mxu0 %v1488
      %1490 = vmatprep.subr.mxu0 0.0
      %v1491 = vand.u32 %v1371, 4294901760
      %v1492 = vsub.f32 %v1371, %v1491
      %v1493 = vand.u32 %v1492, 4294901760
      %v1494 = vsub.f32 %v1492, %v1493
      %v1495 = vand.u32 %v1494, 4294901760
      %1496 = vmatpush1.msra.mxu0 %v1495
      %1497 = vmatprep.subr.mxu0 0.0
      %v1498 = vand.u32 %v1372, 4294901760
      %v1499 = vsub.f32 %v1372, %v1498
      %v1500 = vand.u32 %v1499, 4294901760
      %v1501 = vsub.f32 %v1499, %v1500
      %v1502 = vand.u32 %v1501, 4294901760
      %1503 = vmatpush1.msra.mxu0 %v1502
      %1504 = vmatprep.subr.mxu0 0.0
      %v1505 = vand.u32 %v1373, 4294901760
      %v1506 = vsub.f32 %v1373, %v1505
      %v1507 = vand.u32 %v1506, 4294901760
      %v1508 = vsub.f32 %v1506, %v1507
      %v1509 = vand.u32 %v1508, 4294901760
      %1510 = vmatpush1.msra.mxu0 %v1509
      %1511 = vmatprep.subr.mxu0 0.0
      %v1512 = vand.u32 %v1374, 4294901760
      %v1513 = vsub.f32 %v1374, %v1512
      %v1514 = vand.u32 %v1513, 4294901760
      %v1515 = vsub.f32 %v1513, %v1514
      %v1516 = vand.u32 %v1515, 4294901760
      %1517 = vmatpush1.msra.mxu0 %v1516
      %1518 = vmatprep.subr.mxu0 0.0
      %v1519 = vand.u32 %v1375, 4294901760
      %v1520 = vsub.f32 %v1375, %v1519
      %v1521 = vand.u32 %v1520, 4294901760
      %v1522 = vsub.f32 %v1520, %v1521
      %v1523 = vand.u32 %v1522, 4294901760
      %1524 = vmatpush1.msra.mxu0 %v1523
      %1525 = vmatprep.subr.mxu0 0.0
      %v1526 = vand.u32 %v1376, 4294901760
      %v1527 = vsub.f32 %v1376, %v1526
      %v1528 = vand.u32 %v1527, 4294901760
      %v1529 = vsub.f32 %v1527, %v1528
      %v1530 = vand.u32 %v1529, 4294901760
      %1531 = vmatpush1.msra.mxu0 %v1530
      %1532 = vmatprep.subr.mxu0 0.0
      %1533 = vmatpush1.msra.mxu0 0.0
      %1534 = vmatprep.subr.mxu0 0.0
      %1535 = vmatpush1.msra.mxu0 0.0
      %1536 = vmatprep.subr.mxu0 0.0
      %1537 = vmatpush1.msra.mxu0 0.0
      %1538 = vmatprep.subr.mxu0 0.0
      %1539 = vmatpush1.msra.mxu0 0.0
      %1540 = vmatprep.subr.mxu0 0.0
      %1541 = vmatpush1.msra.mxu0 0.0
      %1542 = vmatprep.subr.mxu0 0.0
      %1543 = vmatpush1.msra.mxu0 0.0
      %1544 = vmatprep.subr.mxu0 0.0
      %1545 = vmatpush1.msra.mxu0 0.0
      %1546 = vmatprep.subr.mxu0 0.0
      %1547 = vmatpush1.msra.mxu0 0.0
      %1548 = vmatprep.subr.mxu0 0.0
      %1549 = vmatpush1.msra.mxu0 0.0
      %1550 = vmatprep.subr.mxu0 0.0
      %1551 = vmatpush1.msra.mxu0 0.0
      %1552 = vmatprep.subr.mxu0 0.0
      %1553 = vmatpush1.msra.mxu0 0.0
      %1554 = vmatprep.subr.mxu0 0.0
      %1555 = vmatpush1.msra.mxu0 0.0
      %1556 = vmatprep.subr.mxu0 0.0
      %1557 = vmatpush1.msra.mxu0 0.0
      %1558 = vmatprep.subr.mxu0 0.0
      %1559 = vmatpush1.msra.mxu0 0.0
      %1560 = vmatprep.subr.mxu0 0.0
      %1561 = vmatpush1.msra.mxu0 0.0
      %1562 = vmatprep.subr.mxu0 0.0
      %1563 = vmatpush1.msra.mxu0 0.0
      %1564 = vmatprep.subr.mxu0 0.0
      %1565 = vmatpush1.msra.mxu0 0.0
      %1566 = vmatprep.subr.mxu0 0.0
      %1567 = vmatpush1.msra.mxu0 0.0
      %1568 = vmatprep.subr.mxu0 0.0
      %1569 = vmatpush1.msra.mxu0 0.0
      %1570 = vmatprep.subr.mxu0 0.0
      %1571 = vmatpush1.msra.mxu0 0.0
      %1572 = vmatprep.subr.mxu0 0.0
      %1573 = vmatpush1.msra.mxu0 0.0
      %1574 = vmatprep.subr.mxu0 0.0
      %1575 = vmatpush1.msra.mxu0 0.0
      %1576 = vmatprep.subr.mxu0 0.0
      %1577 = vmatpush1.msra.mxu0 0.0
      %1578 = vmatprep.subr.mxu0 0.0
      %1579 = vmatpush1.msra.mxu0 0.0
      %1580 = vmatprep.mubr.f32.mxu0 0.0
      %v1581 = vand.u32 %v1378, 4294901760
      %1582 = vmatmul.mubr.f32.gmra.mrb[0].mxu0 %v1581
      %v1583 = vpop.f32.mrb[0].mxu0
      %v1584 = vadd.f32 %v1463, %v1583
      %v1585 = vpop.f32.mrb[0].mxu0
      %1586 = vmatprep.mubr.f32.mxu0 0.0
      %v1587 = vand.u32 %v1381, 4294901760
      %1588 = vmatmul.mubr.f32.gmra.mrb[0].mxu0 %v1587
      %v1589 = vpop.f32.mrb[0].mxu0
      %v1590 = vadd.f32 %v1473, %v1589
      %v1591 = vpop.f32.mrb[0].mxu0
      %1592 = vdwg.mxu0
      %1593 = vmatprep.subr.mxu0 0.0
      %v1594 = vand.u32 %v1369, 4294901760
      %v1595 = vsub.f32 %v1369, %v1594
      %1596 = vmatpush1.msra.mxu0 %v1595
      %1597 = vmatprep.subr.mxu0 0.0
      %v1598 = vand.u32 %v1370, 4294901760
      %v1599 = vsub.f32 %v1370, %v1598
      %1600 = vmatpush1.msra.mxu0 %v1599
      %1601 = vmatprep.subr.mxu0 0.0
      %v1602 = vand.u32 %v1371, 4294901760
      %v1603 = vsub.f32 %v1371, %v1602
      %1604 = vmatpush1.msra.mxu0 %v1603
      %1605 = vmatprep.subr.mxu0 0.0
      %v1606 = vand.u32 %v1372, 4294901760
      %v1607 = vsub.f32 %v1372, %v1606
      %1608 = vmatpush1.msra.mxu0 %v1607
      %1609 = vmatprep.subr.mxu0 0.0
      %v1610 = vand.u32 %v1373, 4294901760
      %v1611 = vsub.f32 %v1373, %v1610
      %1612 = vmatpush1.msra.mxu0 %v1611
      %1613 = vmatprep.subr.mxu0 0.0
      %v1614 = vand.u32 %v1374, 4294901760
      %v1615 = vsub.f32 %v1374, %v1614
      %1616 = vmatpush1.msra.mxu0 %v1615
      %1617 = vmatprep.subr.mxu0 0.0
      %v1618 = vand.u32 %v1375, 4294901760
      %v1619 = vsub.f32 %v1375, %v1618
      %1620 = vmatpush1.msra.mxu0 %v1619
      %1621 = vmatprep.subr.mxu0 0.0
      %v1622 = vand.u32 %v1376, 4294901760
      %v1623 = vsub.f32 %v1376, %v1622
      %1624 = vmatpush1.msra.mxu0 %v1623
      %1625 = vmatprep.subr.mxu0 0.0
      %1626 = vmatpush1.msra.mxu0 0.0
      %1627 = vmatprep.subr.mxu0 0.0
      %1628 = vmatpush1.msra.mxu0 0.0
      %1629 = vmatprep.subr.mxu0 0.0
      %1630 = vmatpush1.msra.mxu0 0.0
      %1631 = vmatprep.subr.mxu0 0.0
      %1632 = vmatpush1.msra.mxu0 0.0
      %1633 = vmatprep.subr.mxu0 0.0
      %1634 = vmatpush1.msra.mxu0 0.0
      %1635 = vmatprep.subr.mxu0 0.0
      %1636 = vmatpush1.msra.mxu0 0.0
      %1637 = vmatprep.subr.mxu0 0.0
      %1638 = vmatpush1.msra.mxu0 0.0
      %1639 = vmatprep.subr.mxu0 0.0
      %1640 = vmatpush1.msra.mxu0 0.0
      %1641 = vmatprep.subr.mxu0 0.0
      %1642 = vmatpush1.msra.mxu0 0.0
      %1643 = vmatprep.subr.mxu0 0.0
      %1644 = vmatpush1.msra.mxu0 0.0
      %1645 = vmatprep.subr.mxu0 0.0
      %1646 = vmatpush1.msra.mxu0 0.0
      %1647 = vmatprep.subr.mxu0 0.0
      %1648 = vmatpush1.msra.mxu0 0.0
      %1649 = vmatprep.subr.mxu0 0.0
      %1650 = vmatpush1.msra.mxu0 0.0
      %1651 = vmatprep.subr.mxu0 0.0
      %1652 = vmatpush1.msra.mxu0 0.0
      %1653 = vmatprep.subr.mxu0 0.0
      %1654 = vmatpush1.msra.mxu0 0.0
      %1655 = vmatprep.subr.mxu0 0.0
      %1656 = vmatpush1.msra.mxu0 0.0
      %1657 = vmatprep.subr.mxu0 0.0
      %1658 = vmatpush1.msra.mxu0 0.0
      %1659 = vmatprep.subr.mxu0 0.0
      %1660 = vmatpush1.msra.mxu0 0.0
      %1661 = vmatprep.subr.mxu0 0.0
      %1662 = vmatpush1.msra.mxu0 0.0
      %1663 = vmatprep.subr.mxu0 0.0
      %1664 = vmatpush1.msra.mxu0 0.0
      %1665 = vmatprep.subr.mxu0 0.0
      %1666 = vmatpush1.msra.mxu0 0.0
      %1667 = vmatprep.subr.mxu0 0.0
      %1668 = vmatpush1.msra.mxu0 0.0
      %1669 = vmatprep.subr.mxu0 0.0
      %1670 = vmatpush1.msra.mxu0 0.0
      %1671 = vmatprep.subr.mxu0 0.0
      %1672 = vmatpush1.msra.mxu0 0.0
      %1673 = vmatprep.mubr.f32.mxu0 0.0
      %v1674 = vand.u32 %v1378, 4294901760
      %v1675 = vsub.f32 %v1378, %v1674
      %1676 = vmatmul.mubr.f32.gmra.mrb[0].mxu0 %v1675
      %v1677 = vpop.f32.mrb[0].mxu0
      %v1678 = vadd.f32 %v1584, %v1677
      %v1679 = vpop.f32.mrb[0].mxu0
      %1680 = vmatprep.mubr.f32.mxu0 0.0
      %v1681 = vand.u32 %v1381, 4294901760
      %v1682 = vsub.f32 %v1381, %v1681
      %1683 = vmatmul.mubr.f32.gmra.mrb[0].mxu0 %v1682
      %v1684 = vpop.f32.mrb[0].mxu0
      %v1685 = vadd.f32 %v1590, %v1684
      %v1686 = vpop.f32.mrb[0].mxu0
      %1687 = vdwg.mxu0
      %1688 = vmatprep.subr.mxu0 0.0
      %v1689 = vand.u32 %v1369, 4294901760
      %1690 = vmatpush1.msra.mxu0 %v1689
      %1691 = vmatprep.subr.mxu0 0.0
      %v1692 = vand.u32 %v1370, 4294901760
      %1693 = vmatpush1.msra.mxu0 %v1692
      %1694 = vmatprep.subr.mxu0 0.0
      %v1695 = vand.u32 %v1371, 4294901760
      %1696 = vmatpush1.msra.mxu0 %v1695
      %1697 = vmatprep.subr.mxu0 0.0
      %v1698 = vand.u32 %v1372, 4294901760
      %1699 = vmatpush1.msra.mxu0 %v1698
      %1700 = vmatprep.subr.mxu0 0.0
      %v1701 = vand.u32 %v1373, 4294901760
      %1702 = vmatpush1.msra.mxu0 %v1701
      %1703 = vmatprep.subr.mxu0 0.0
      %v1704 = vand.u32 %v1374, 4294901760
      %1705 = vmatpush1.msra.mxu0 %v1704
      %1706 = vmatprep.subr.mxu0 0.0
      %v1707 = vand.u32 %v1375, 4294901760
      %1708 = vmatpush1.msra.mxu0 %v1707
      %1709 = vmatprep.subr.mxu0 0.0
      %v1710 = vand.u32 %v1376, 4294901760
      %1711 = vmatpush1.msra.mxu0 %v1710
      %1712 = vmatprep.subr.mxu0 0.0
      %1713 = vmatpush1.msra.mxu0 0.0
      %1714 = vmatprep.subr.mxu0 0.0
      %1715 = vmatpush1.msra.mxu0 0.0
      %1716 = vmatprep.subr.mxu0 0.0
      %1717 = vmatpush1.msra.mxu0 0.0
      %1718 = vmatprep.subr.mxu0 0.0
      %1719 = vmatpush1.msra.mxu0 0.0
      %1720 = vmatprep.subr.mxu0 0.0
      %1721 = vmatpush1.msra.mxu0 0.0
      %1722 = vmatprep.subr.mxu0 0.0
      %1723 = vmatpush1.msra.mxu0 0.0
      %1724 = vmatprep.subr.mxu0 0.0
      %1725 = vmatpush1.msra.mxu0 0.0
      %1726 = vmatprep.subr.mxu0 0.0
      %1727 = vmatpush1.msra.mxu0 0.0
      %1728 = vmatprep.subr.mxu0 0.0
      %1729 = vmatpush1.msra.mxu0 0.0
      %1730 = vmatprep.subr.mxu0 0.0
      %1731 = vmatpush1.msra.mxu0 0.0
      %1732 = vmatprep.subr.mxu0 0.0
      %1733 = vmatpush1.msra.mxu0 0.0
      %1734 = vmatprep.subr.mxu0 0.0
      %1735 = vmatpush1.msra.mxu0 0.0
      %1736 = vmatprep.subr.mxu0 0.0
      %1737 = vmatpush1.msra.mxu0 0.0
      %1738 = vmatprep.subr.mxu0 0.0
      %1739 = vmatpush1.msra.mxu0 0.0
      %1740 = vmatprep.subr.mxu0 0.0
      %1741 = vmatpush1.msra.mxu0 0.0
      %1742 = vmatprep.subr.mxu0 0.0
      %1743 = vmatpush1.msra.mxu0 0.0
      %1744 = vmatprep.subr.mxu0 0.0
      %1745 = vmatpush1.msra.mxu0 0.0
      %1746 = vmatprep.subr.mxu0 0.0
      %1747 = vmatpush1.msra.mxu0 0.0
      %1748 = vmatprep.subr.mxu0 0.0
      %1749 = vmatpush1.msra.mxu0 0.0
      %1750 = vmatprep.subr.mxu0 0.0
      %1751 = vmatpush1.msra.mxu0 0.0
      %1752 = vmatprep.subr.mxu0 0.0
      %1753 = vmatpush1.msra.mxu0 0.0
      %1754 = vmatprep.subr.mxu0 0.0
      %1755 = vmatpush1.msra.mxu0 0.0
      %1756 = vmatprep.subr.mxu0 0.0
      %1757 = vmatpush1.msra.mxu0 0.0
      %1758 = vmatprep.subr.mxu0 0.0
      %1759 = vmatpush1.msra.mxu0 0.0
      %1760 = vmatprep.mubr.f32.mxu0 0.0
      %v1761 = vand.u32 %v1378, 4294901760
      %v1762 = vsub.f32 %v1378, %v1761
      %v1763 = vand.u32 %v1762, 4294901760
      %1764 = vmatmul.mubr.f32.gmra.mrb[0].mxu0 %v1763
      %v1765 = vpop.f32.mrb[0].mxu0
      %v1766 = vadd.f32 %v1678, %v1765
      %v1767 = vpop.f32.mrb[0].mxu0
      %1768 = vmatprep.mubr.f32.mxu0 0.0
      %v1769 = vand.u32 %v1381, 4294901760
      %v1770 = vsub.f32 %v1381, %v1769
      %v1771 = vand.u32 %v1770, 4294901760
      %1772 = vmatmul.mubr.f32.gmra.mrb[0].mxu0 %v1771
      %v1773 = vpop.f32.mrb[0].mxu0
      %v1774 = vadd.f32 %v1685, %v1773
      %v1775 = vpop.f32.mrb[0].mxu0
      %1776 = vdwg.mxu0
      %1777 = vmatprep.subr.mxu0 0.0
      %v1778 = vand.u32 %v1369, 4294901760
      %v1779 = vsub.f32 %v1369, %v1778
      %v1780 = vand.u32 %v1779, 4294901760
      %1781 = vmatpush1.msra.mxu0 %v1780
      %1782 = vmatprep.subr.mxu0 0.0
      %v1783 = vand.u32 %v1370, 4294901760
      %v1784 = vsub.f32 %v1370, %v1783
      %v1785 = vand.u32 %v1784, 4294901760
      %1786 = vmatpush1.msra.mxu0 %v1785
      %1787 = vmatprep.subr.mxu0 0.0
      %v1788 = vand.u32 %v1371, 4294901760
      %v1789 = vsub.f32 %v1371, %v1788
      %v1790 = vand.u32 %v1789, 4294901760
      %1791 = vmatpush1.msra.mxu0 %v1790
      %1792 = vmatprep.subr.mxu0 0.0
      %v1793 = vand.u32 %v1372, 4294901760
      %v1794 = vsub.f32 %v1372, %v1793
      %v1795 = vand.u32 %v1794, 4294901760
      %1796 = vmatpush1.msra.mxu0 %v1795
      %1797 = vmatprep.subr.mxu0 0.0
      %v1798 = vand.u32 %v1373, 4294901760
      %v1799 = vsub.f32 %v1373, %v1798
      %v1800 = vand.u32 %v1799, 4294901760
      %1801 = vmatpush1.msra.mxu0 %v1800
      %1802 = vmatprep.subr.mxu0 0.0
      %v1803 = vand.u32 %v1374, 4294901760
      %v1804 = vsub.f32 %v1374, %v1803
      %v1805 = vand.u32 %v1804, 4294901760
      %1806 = vmatpush1.msra.mxu0 %v1805
      %1807 = vmatprep.subr.mxu0 0.0
      %v1808 = vand.u32 %v1375, 4294901760
      %v1809 = vsub.f32 %v1375, %v1808
      %v1810 = vand.u32 %v1809, 4294901760
      %1811 = vmatpush1.msra.mxu0 %v1810
      %1812 = vmatprep.subr.mxu0 0.0
      %v1813 = vand.u32 %v1376, 4294901760
      %v1814 = vsub.f32 %v1376, %v1813
      %v1815 = vand.u32 %v1814, 4294901760
      %1816 = vmatpush1.msra.mxu0 %v1815
      %1817 = vmatprep.subr.mxu0 0.0
      %1818 = vmatpush1.msra.mxu0 0.0
      %1819 = vmatprep.subr.mxu0 0.0
      %1820 = vmatpush1.msra.mxu0 0.0
      %1821 = vmatprep.subr.mxu0 0.0
      %1822 = vmatpush1.msra.mxu0 0.0
      %1823 = vmatprep.subr.mxu0 0.0
      %1824 = vmatpush1.msra.mxu0 0.0
      %1825 = vmatprep.subr.mxu0 0.0
      %1826 = vmatpush1.msra.mxu0 0.0
      %1827 = vmatprep.subr.mxu0 0.0
      %1828 = vmatpush1.msra.mxu0 0.0
      %1829 = vmatprep.subr.mxu0 0.0
      %1830 = vmatpush1.msra.mxu0 0.0
      %1831 = vmatprep.subr.mxu0 0.0
      %1832 = vmatpush1.msra.mxu0 0.0
      %1833 = vmatprep.subr.mxu0 0.0
      %1834 = vmatpush1.msra.mxu0 0.0
      %1835 = vmatprep.subr.mxu0 0.0
      %1836 = vmatpush1.msra.mxu0 0.0
      %1837 = vmatprep.subr.mxu0 0.0
      %1838 = vmatpush1.msra.mxu0 0.0
      %1839 = vmatprep.subr.mxu0 0.0
      %1840 = vmatpush1.msra.mxu0 0.0
      %1841 = vmatprep.subr.mxu0 0.0
      %1842 = vmatpush1.msra.mxu0 0.0
      %1843 = vmatprep.subr.mxu0 0.0
      %1844 = vmatpush1.msra.mxu0 0.0
      %1845 = vmatprep.subr.mxu0 0.0
      %1846 = vmatpush1.msra.mxu0 0.0
      %1847 = vmatprep.subr.mxu0 0.0
      %1848 = vmatpush1.msra.mxu0 0.0
      %1849 = vmatprep.subr.mxu0 0.0
      %1850 = vmatpush1.msra.mxu0 0.0
      %1851 = vmatprep.subr.mxu0 0.0
      %1852 = vmatpush1.msra.mxu0 0.0
      %1853 = vmatprep.subr.mxu0 0.0
      %1854 = vmatpush1.msra.mxu0 0.0
      %1855 = vmatprep.subr.mxu0 0.0
      %1856 = vmatpush1.msra.mxu0 0.0
      %1857 = vmatprep.subr.mxu0 0.0
      %1858 = vmatpush1.msra.mxu0 0.0
      %1859 = vmatprep.subr.mxu0 0.0
      %1860 = vmatpush1.msra.mxu0 0.0
      %1861 = vmatprep.subr.mxu0 0.0
      %1862 = vmatpush1.msra.mxu0 0.0
      %1863 = vmatprep.subr.mxu0 0.0
      %1864 = vmatpush1.msra.mxu0 0.0
      %1865 = vmatprep.mubr.f32.mxu0 0.0
      %v1866 = vand.u32 %v1378, 4294901760
      %1867 = vmatmul.mubr.f32.gmra.mrb[0].mxu0 %v1866
      %v1868 = vpop.f32.mrb[0].mxu0
      %v1869 = vadd.f32 %v1766, %v1868
      %v1870 = vpop.f32.mrb[0].mxu0
      %1871 = vmatprep.mubr.f32.mxu0 0.0
      %v1872 = vand.u32 %v1381, 4294901760
      %1873 = vmatmul.mubr.f32.gmra.mrb[0].mxu0 %v1872
      %v1874 = vpop.f32.mrb[0].mxu0
      %v1875 = vadd.f32 %v1774, %v1874
      %v1876 = vpop.f32.mrb[0].mxu0
      %1877 = vdwg.mxu0
      %1878 = vmatprep.subr.mxu0 0.0
      %v1879 = vand.u32 %v1369, 4294901760
      %1880 = vmatpush1.msra.mxu0 %v1879
      %1881 = vmatprep.subr.mxu0 0.0
      %v1882 = vand.u32 %v1370, 4294901760
      %1883 = vmatpush1.msra.mxu0 %v1882
      %1884 = vmatprep.subr.mxu0 0.0
      %v1885 = vand.u32 %v1371, 4294901760
      %1886 = vmatpush1.msra.mxu0 %v1885
      %1887 = vmatprep.subr.mxu0 0.0
      %v1888 = vand.u32 %v1372, 4294901760
      %1889 = vmatpush1.msra.mxu0 %v1888
      %1890 = vmatprep.subr.mxu0 0.0
      %v1891 = vand.u32 %v1373, 4294901760
      %1892 = vmatpush1.msra.mxu0 %v1891
      %1893 = vmatprep.subr.mxu0 0.0
      %v1894 = vand.u32 %v1374, 4294901760
      %1895 = vmatpush1.msra.mxu0 %v1894
      %1896 = vmatprep.subr.mxu0 0.0
      %v1897 = vand.u32 %v1375, 4294901760
      %1898 = vmatpush1.msra.mxu0 %v1897
      %1899 = vmatprep.subr.mxu0 0.0
      %v1900 = vand.u32 %v1376, 4294901760
      %1901 = vmatpush1.msra.mxu0 %v1900
      %1902 = vmatprep.subr.mxu0 0.0
      %1903 = vmatpush1.msra.mxu0 0.0
      %1904 = vmatprep.subr.mxu0 0.0
      %1905 = vmatpush1.msra.mxu0 0.0
      %1906 = vmatprep.subr.mxu0 0.0
      %1907 = vmatpush1.msra.mxu0 0.0
      %1908 = vmatprep.subr.mxu0 0.0
      %1909 = vmatpush1.msra.mxu0 0.0
      %1910 = vmatprep.subr.mxu0 0.0
      %1911 = vmatpush1.msra.mxu0 0.0
      %1912 = vmatprep.subr.mxu0 0.0
      %1913 = vmatpush1.msra.mxu0 0.0
      %1914 = vmatprep.subr.mxu0 0.0
      %1915 = vmatpush1.msra.mxu0 0.0
      %1916 = vmatprep.subr.mxu0 0.0
      %1917 = vmatpush1.msra.mxu0 0.0
      %1918 = vmatprep.subr.mxu0 0.0
      %1919 = vmatpush1.msra.mxu0 0.0
      %1920 = vmatprep.subr.mxu0 0.0
      %1921 = vmatpush1.msra.mxu0 0.0
      %1922 = vmatprep.subr.mxu0 0.0
      %1923 = vmatpush1.msra.mxu0 0.0
      %1924 = vmatprep.subr.mxu0 0.0
      %1925 = vmatpush1.msra.mxu0 0.0
      %1926 = vmatprep.subr.mxu0 0.0
      %1927 = vmatpush1.msra.mxu0 0.0
      %1928 = vmatprep.subr.mxu0 0.0
      %1929 = vmatpush1.msra.mxu0 0.0
      %1930 = vmatprep.subr.mxu0 0.0
      %1931 = vmatpush1.msra.mxu0 0.0
      %1932 = vmatprep.subr.mxu0 0.0
      %1933 = vmatpush1.msra.mxu0 0.0
      %1934 = vmatprep.subr.mxu0 0.0
      %1935 = vmatpush1.msra.mxu0 0.0
      %1936 = vmatprep.subr.mxu0 0.0
      %1937 = vmatpush1.msra.mxu0 0.0
      %1938 = vmatprep.subr.mxu0 0.0
      %1939 = vmatpush1.msra.mxu0 0.0
      %1940 = vmatprep.subr.mxu0 0.0
      %1941 = vmatpush1.msra.mxu0 0.0
      %1942 = vmatprep.subr.mxu0 0.0
      %1943 = vmatpush1.msra.mxu0 0.0
      %1944 = vmatprep.subr.mxu0 0.0
      %1945 = vmatpush1.msra.mxu0 0.0
      %1946 = vmatprep.subr.mxu0 0.0
      %1947 = vmatpush1.msra.mxu0 0.0
      %1948 = vmatprep.subr.mxu0 0.0
      %1949 = vmatpush1.msra.mxu0 0.0
      %1950 = vmatprep.mubr.f32.mxu0 0.0
      %v1951 = vand.u32 %v1378, 4294901760
      %1952 = vmatmul.mubr.f32.gmra.mrb[0].mxu0 %v1951
      %v1953 = vpop.f32.mrb[0].mxu0
      %v1954 = vadd.f32 %v1869, %v1953
      %v1955 = vpop.f32.mrb[0].mxu0
      %1956 = vmatprep.mubr.f32.mxu0 0.0
      %v1957 = vand.u32 %v1381, 4294901760
      %1958 = vmatmul.mubr.f32.gmra.mrb[0].mxu0 %v1957
      %v1959 = vpop.f32.mrb[0].mxu0
      %v1960 = vadd.f32 %v1875, %v1959
      %v1961 = vpop.f32.mrb[0].mxu0
      %1962 = vdwg.mxu0
      %v1963 = vadd.f32 %v1357, %v1954
      %v1964 = vadd.f32 %v1363, %v1960
      %v1966 = vlaneseq
      %v1967 = vshrl.u32 %v1966, 7
      %v1968 = vsub.s32 0, %v1967
      %v1969 = vrot.slane %v171, %v1968
      %v1971 = vadd.f32 %v1963, %v1969
      %v1972 = vadd.f32 %v1964, %v1969
      %v1973 = vmax.f32 %v1971, 0.0
      %v1974 = vmax.f32 %v1972, 0.0
      %1975 = vst [vmem:[%s170] sm:$0xff] %v1973
      %1976 = vst [vmem:[%s170 + $0x8] sm:$0xff] %v1974
      %p1977 = scmp.lt.s32.totalorder %s14, 1
      %s1978 = scalar_select %p1977, %s14, 1
      %s1979 = smul.addr %s1978, 2
      %s1980 = smul.addr %s1979, 8
      %s1981 = scalar_lea.vmem %s3, %s1980
      // Predicated region
      $region33: #{conv_bn_act.1} parent=31 // pred_check
        %p1982 = pneg %p100
      $region34: #{conv_bn_act.1} parent=31 // pred_check_branch
        %1984 = sbr.rel (%p1982) target = $region36
      $region35: #{conv_bn_act.1} parent=31 // pred_region
        _
      $region36: #{conv_bn_act.1} parent=31 // pred_fallthru
        _
    $region32: #{conv_bn_act.1} parent=5 // pred_fallthru
      _
    %p1985 = scmp.le.s32.totalorder 2, %s9
    // Predicated region
    $region37: #{conv_bn_act.1} parent=5 // pred_check
      %p1986 = pneg %p1985
    $region38: #{conv_bn_act.1} parent=5 // pred_check_branch
      %1988 = sbr.rel (%p1986) target = $region40
    $region39: #{conv_bn_act.1} parent=5 // pred_region
      %s1989 = ssub.s32 %s9, 2
      // Predicated region
      $region41: #{conv_bn_act.1} parent=39 // pred_check
        %p1990 = pneg %p106
      $region42: #{conv_bn_act.1} parent=39 // pred_check_branch
        %1992 = sbr.rel (%p1990) target = $region44
      $region43: #{conv_bn_act.1} parent=39 // pred_region
        %p1993 = scmp.lt.s32.totalorder %s15, 1
        %s1994 = scalar_select %p1993, %s15, 1
        %s1995 = smul.addr %s1994, 2
        %s1996 = smul.addr %s1995, 8
        %s1997 = scalar_lea.vmem %s3, %s1996
      $region44: #{conv_bn_act.1} parent=39 // pred_fallthru
        _
    $region40: #{conv_bn_act.1} parent=5 // pred_fallthru
      _
  $region6: #{conv_bn_act.1} parent=0 // loop_footer
    %s13 = sadd.s32 1, %s9
  $region7: #{conv_bn_act.1} parent=0 // loop_footer_branch
    %8 = sbr.rel target = $region3
  $region8: #{conv_bn_act.1} parent=0 // loop_exit
    _

</llo_original>
